<compile_context>
chip_gen: v7x
topology: tpu7x:2x2x1
jax: 0.10.0
libtpu: 0.0.40
codegen_flags: <defaults>
</compile_context>

<pallas_src>
import numpy as np
import jax
import jax.numpy as jnp
from jax.experimental import pallas as pl
from jax.experimental.pallas import tpu as pltpu

K = 5      # Conv1d kernel size
PAD = 2    # Conv1d padding
CIN = 3    # channels / LSTM input features
NG = 4     # LSTM gates (i, f, g, o)


def _al8(n):
    return ((n + 7) // 8) * 8


def _layout(T, B, H, L=3, C=CIN):
    """Static row/lane offsets for the two packed parameter slabs."""
    R = B * C
    RP = _al8(R)
    TR = T * R
    lay = dict(T=T, B=B, H=H, L=L, C=C, R=R, RP=RP, TR=TR)
    # conv / routing-constants slab (narrow lanes)
    lay["c_lanes"] = max(RP, T)
    lay["c_bias"] = L * K * RP
    lay["c_g"] = _al8(lay["c_bias"] + L * RP)
    lay["c_sel"] = _al8(lay["c_g"] + TR)
    lay["c_rows"] = _al8(lay["c_sel"] + TR)
    # wide weight slab (8H lanes)
    lay["w_lanes"] = 8 * H
    lay["w_bias"] = 2 * H
    lay["w_sc"] = _al8(lay["w_bias"] + 1)
    lay["w_sh"] = _al8(lay["w_sc"] + 1)
    lay["w_wf"] = _al8(lay["w_sh"] + 1)
    lay["w_um"] = _al8(lay["w_wf"] + TR)
    lay["w_lin"] = _al8(lay["w_um"] + (T + 1) * B)
    lay["w_linb"] = _al8(lay["w_lin"] + H)
    lay["w_rows"] = _al8(lay["w_linb"] + 1)
    return lay


def prepare_params(params, T, B):
    """One-time host-side packing of all parameters & constants into 2 slabs."""
    H = int(params["wh0"].shape[0])
    L = int(params["conv_w"].shape[0])
    lay = _layout(T, B, H, L)
    C, R, RP, TR = lay["C"], lay["R"], lay["RP"], lay["TR"]

    conv_w = np.asarray(params["conv_w"], np.float32)       # (L, Cout, Cin, K)
    conv_b = np.asarray(params["conv_b"], np.float32)       # (L, Cout)
    wi0 = np.asarray(params["wi0"], np.float32)             # (C, 4H)
    wh0 = np.asarray(params["wh0"], np.float32)             # (H, 4H)
    wi1 = np.asarray(params["wi1"], np.float32)             # (H, 4H)
    wh1 = np.asarray(params["wh1"], np.float32)             # (H, 4H)
    b0 = np.asarray(params["b0"], np.float32).reshape(-1)
    b1 = np.asarray(params["b1"], np.float32).reshape(-1)
    lin_w = np.asarray(params["lin_w"], np.float32)          # (H, H)
    lin_b = np.asarray(params["lin_b"], np.float32).reshape(-1)

    # ---- conv / routing-constants slab -------------------------------------
    cslab = np.zeros((lay["c_rows"], lay["c_lanes"]), np.float32)
    for l in range(L):
        base = l * K * RP
        for k in range(K):
            for b in range(B):      # block-diagonal over the batch
                r0 = base + k * RP + b * C
                c0 = b * C
                cslab[r0:r0 + C, c0:c0 + C] = conv_w[l, :, :, k]
        brow = np.zeros((RP,), np.float32)
        brow[:R] = np.tile(conv_b[l], B)
        cslab[lay["c_bias"] + l * RP:lay["c_bias"] + (l + 1) * RP, 0:T] = brow[:, None]
    for t in range(T):
        for r in range(R):
            cslab[lay["c_g"] + t * R + r, r] = 1.0       # row-replication matrix
            cslab[lay["c_sel"] + t * R + r, t] = 1.0     # per-row time selector

    # ---- wide weight slab: gates interleaved [i0 i1 f0 f1 g0 g1 o0 o1] ------
    wslab = np.zeros((lay["w_rows"], lay["w_lanes"]), np.float32)

    def lo0(g):  # layer-0 block of gate g
        return slice(2 * g * H, (2 * g + 1) * H)

    def lo1(g):  # layer-1 block of gate g
        return slice((2 * g + 1) * H, (2 * g + 2) * H)

    for g in range(NG):
        old = slice(g * H, (g + 1) * H)
        wslab[0:H, lo0(g)] = wh0[:, old]          # h0_prev -> layer-0 gates
        wslab[0:H, lo1(g)] = wi1[:, old]          # h0_prev -> layer-1 gates (skew)
        wslab[H:2 * H, lo1(g)] = wh1[:, old]      # h1_prev -> layer-1 gates
        wslab[lay["w_bias"], lo0(g)] = b0[old]
        wslab[lay["w_bias"], lo1(g)] = b1[old]
        sc = 1.0 if g == 2 else 0.5               # tanh block vs sigmoid-via-tanh
        sh = 0.0 if g == 2 else 0.5
        wslab[lay["w_sc"], lo0(g)] = sc
        wslab[lay["w_sc"], lo1(g)] = sc
        wslab[lay["w_sh"], lo0(g)] = sh
        wslab[lay["w_sh"], lo1(g)] = sh

    # torch flat reshape (B*3,T)->(T,B,3) folded together with wi0 (layer-0 proj)
    for t in range(T):
        for r in range(R):
            f = r * T + t
            m = f // C                            # destination row t_lstm*B + b
            ch = f % C                            # LSTM input feature
            wslab[lay["w_um"] + m, t * R + r] = 1.0
            for g in range(NG):
                wslab[lay["w_wf"] + t * R + r, lo0(g)] = wi0[ch, g * H:(g + 1) * H]
    # rows w_um + T*B .. w_um + (T+1)*B stay zero: dummy block for the skew epilogue

    wslab[lay["w_lin"]:lay["w_lin"] + H, 0:H] = lin_w
    wslab[lay["w_linb"], 0:H] = lin_b

    slabs = dict(cslab=jnp.asarray(cslab), wslab=jnp.asarray(wslab))
    return slabs, lay


def make_rnn_forward(lay):
    T, B, H, L = lay["T"], lay["B"], lay["H"], lay["L"]
    R, RP, TR = lay["R"], lay["RP"], lay["TR"]
    c_bias, c_g, c_sel = lay["c_bias"], lay["c_g"], lay["c_sel"]
    w_bias, w_sc, w_sh = lay["w_bias"], lay["w_sc"], lay["w_sh"]
    w_wf, w_um, w_lin, w_linb = lay["w_wf"], lay["w_um"], lay["w_lin"], lay["w_linb"]
    H2 = 2 * H

    def kernel(xz_ref, sw_ref, cslab_ref, wslab_ref, o_ref):
        f32 = jnp.float32

        # ---- Conv1d(3,3,5,pad=2) x3: 1 MXU pass / layer, taps = lane shifts ----
        cur = xz_ref[...]                                        # (RP, T)
        for l in range(L):
            cw = cslab_ref[l * K * RP:(l + 1) * K * RP, 0:RP]    # (K*RP, RP)
            p = jnp.dot(cw, cur, preferred_element_type=f32)     # per-tap partials
            terms = [cslab_ref[c_bias + l * RP:c_bias + (l + 1) * RP, 0:T]]
            for k in range(K):
                pk = p[k * RP:(k + 1) * RP, :]
                s = k - PAD
                if s > 0:       # out[:, t] = partial[:, t+s], zero-filled at the end
                    pk = jnp.concatenate([pk[:, s:], jnp.zeros((RP, s), f32)], axis=1)
                elif s < 0:
                    pk = jnp.concatenate([jnp.zeros((RP, -s), f32), pk[:, :T + s]],
                                         axis=1)
                terms.append(pk)
            while len(terms) > 1:                                # balanced add tree
                terms = [terms[i] + terms[i + 1] if i + 1 < len(terms) else terms[i]
                         for i in range(0, len(terms), 2)]
            cur = terms[0]

        # ---- flat reshape + LSTM layer-0 input projection, folded into constants ----
        g_mat = cslab_ref[c_g:c_g + TR, 0:RP]                    # (TR, RP)
        csel = cslab_ref[c_sel:c_sel + TR, 0:T]                  # (TR, T)
        rep = jnp.dot(g_mat, cur, preferred_element_type=f32)    # (TR, T)
        cur_col = jnp.sum(rep * csel, axis=1, keepdims=True)     # (TR,1): cur[r,t] at t*R+r
        wf = wslab_ref[w_wf:w_wf + TR, :]                        # (TR, 8H)
        um = wslab_ref[w_um:w_um + (T + 1) * B, 0:TR]            # ((T+1)B, TR)
        bias = wslab_ref[w_bias:w_bias + 1, :]                   # (1, 8H) = [b0|b1] interleaved
        gx = jnp.dot(um, cur_col * wf, preferred_element_type=f32) + bias

        # ---- skewed, fused 2-layer LSTM: 1 MXU pass + 2 EUP passes per step ----
        w_rec = wslab_ref[0:H2, :]                               # (2H, 8H)
        sc = wslab_ref[w_sc:w_sc + 1, :]                         # 0.5 (sigmoid) / 1.0 (tanh)
        sh = wslab_ref[w_sh:w_sh + 1, :]                         # 0.5 / 0.0
        lane = jax.lax.broadcasted_iota(jnp.int32, (1, H2), 1)
        l0mask = (lane < H).astype(f32)

        hcat = jnp.zeros((B, H2), f32)     # [h0[t-1] | h1[t-2]]
        ccat = jnp.zeros((B, H2), f32)
        acc = jnp.zeros((B, H2), f32)
        # TODO(synk): inter-layer LSTM dropout (p=0.5) is identity in eval mode.
        for t in range(T + 1):             # fully unrolled; T is small and static
            gadd = gx[t * B:(t + 1) * B, :]
            if t == 0:
                gall = gadd                # all hidden state is zero at t=0
            else:
                gall = gadd + jnp.dot(hcat, w_rec, preferred_element_type=f32)
            # one EUP pass for all gates of both layers: sigmoid(x)=0.5*tanh(0.5x)+0.5
            gt = jnp.tanh(gall * sc) * sc + sh
            icat = gt[:, 0 * H2:1 * H2]
            fcat = gt[:, 1 * H2:2 * H2]
            gcat = gt[:, 2 * H2:3 * H2]
            ocat = gt[:, 3 * H2:4 * H2]
            ccat = fcat * ccat + icat * gcat
            hcat = ocat * jnp.tanh(ccat)
            if t == 0:
                ccat = ccat * l0mask       # layer 1 has not started yet (skew)
                hcat = hcat * l0mask
            else:
                # acc[:, H:] += sw[t-1] * h1[t-1]; acc[:, :H] is never read.
                acc = acc + sw_ref[t - 1] * hcat

        h_mean = acc[:, H:H2]              # pad_packed mask + mean over max(x_lens)

        # ---- Linear + ReLU epilogue ----
        # TODO(synk): nn.Dropout layers are identity in eval mode (not modelled).
        lw = wslab_ref[w_lin:w_lin + H, 0:H]
        lb = wslab_ref[w_linb:w_linb + 1, 0:H]
        y = jnp.dot(h_mean, lw, preferred_element_type=f32) + lb
        o_ref[...] = jnp.maximum(y, 0.0).astype(o_ref.dtype)

    vmem = pl.BlockSpec(memory_space=pltpu.MemorySpace.VMEM)
    call = pl.pallas_call(
        kernel,
        out_shape=jax.ShapeDtypeStruct((B, H), jnp.float32),
        in_specs=[vmem] * 4,
        out_specs=vmem,
    )
    # TODO(synk): for much larger T/B, add a 'parallel' batch grid axis (v7x has
    # 2 TensorCores) and tile time with carried VMEM scratch instead of full residency.

    @jax.jit
    def forward(x, x_lens, cslab, wslab):
        # torch: x.reshape(B, 3, T) is a free row-major flat reshape; rows r = b*3 + c.
        xz = x.astype(jnp.float32).reshape(R, T)
        xz = jnp.pad(xz, ((0, RP - R), (0, 0)))
        # pack/pad_packed semantics: outputs at t >= len are zero; mean divides by
        # max(x_lens).  Fold both into a (T, B, 1) per-step weight.
        max_len = jnp.maximum(jnp.max(x_lens), 1).astype(jnp.float32)
        mask = (jnp.arange(T)[:, None] < x_lens[None, :]).astype(jnp.float32)
        sw = (mask / max_len)[:, :, None]
        return call(xz, sw, cslab, wslab)

    return forward


def init_params(key, h=32):
    ks = jax.random.split(key, 12)
    s = 0.2
    p = {}
    # Conv1d(3,3,5,pad=2) x3 in torch layout (layer, Cout, Cin, K) + bias (layer, Cout).
    p["conv_w"] = jax.random.normal(ks[0], (3, CIN, CIN, K), jnp.float32) * s
    p["conv_b"] = jax.random.normal(ks[1], (3, CIN), jnp.float32) * 0.1
    # LSTM layer 0: torch W_ih (4h,3), W_hh (4h,h) pre-transposed; bias = b_ih + b_hh.
    p["wi0"] = jax.random.normal(ks[2], (CIN, 4 * h), jnp.float32) * s
    p["wh0"] = jax.random.normal(ks[3], (h, 4 * h), jnp.float32) * s
    p["b0"] = (jax.random.normal(ks[4], (1, 4 * h), jnp.float32) * 0.1
               + jax.random.normal(ks[5], (1, 4 * h), jnp.float32) * 0.1)
    # LSTM layer 1 (input is h).
    p["wi1"] = jax.random.normal(ks[6], (h, 4 * h), jnp.float32) * s
    p["wh1"] = jax.random.normal(ks[7], (h, 4 * h), jnp.float32) * s
    p["b1"] = (jax.random.normal(ks[8], (1, 4 * h), jnp.float32) * 0.1
               + jax.random.normal(ks[9], (1, 4 * h), jnp.float32) * 0.1)
    # Linear(h,h): torch weight (out,in); stored transposed (in,out).
    p["lin_w"] = jax.random.normal(ks[10], (h, h), jnp.float32) * s
    p["lin_b"] = jax.random.normal(ks[11], (1, h), jnp.float32) * 0.1
    return p


if __name__ == "__main__":
    key = jax.random.PRNGKey(0)
    kx, kp = jax.random.split(key)
    T, B, h = 8, 2, 32
    x = jax.random.normal(kx, (T, B, CIN), jnp.float32)
    x_lens = jnp.array([6, 8], dtype=jnp.int32)   # enforce_sorted=False: any order
    params = init_params(kp, h=h)
    slabs, lay = prepare_params(params, T, B)     # one-time host-side packing
    rnn_forward = make_rnn_forward(lay)
    out = rnn_forward(x, x_lens, slabs["cslab"], slabs["wslab"])
    jax.block_until_ready(out)
    assert out.shape == (B, h) and out.dtype == jnp.float32
    print("KERNEL_OK")
</pallas_src>

<mosaic_0001>
module attributes {stable_mosaic.version = 11 : i64} {
  func.func @kernel(%arg0: memref<8x8xf32, #tpu.memory_space<vmem>>, %arg1: memref<8x2x1xf32, #tpu.memory_space<vmem>>, %arg2: memref<240x8xf32, #tpu.memory_space<vmem>>, %arg3: memref<200x256xf32, #tpu.memory_space<vmem>>, %arg4: memref<2x32xf32, #tpu.memory_space<vmem>>) attributes {dimension_semantics = [], scalar_prefetch = 0 : i64, scratch_operands = 0 : i64, tpu.core_type = #tpu.core_type<tc>} {
    %c0 = arith.constant 0 : index
    %c0_0 = arith.constant 0 : index
    %0 = vector.load %arg0[%c0, %c0_0] : memref<8x8xf32, #tpu.memory_space<vmem>>, vector<8x8xf32>
    %c0_1 = arith.constant 0 : index
    %c0_2 = arith.constant 0 : index
    %1 = vector.load %arg2[%c0_1, %c0_2] : memref<240x8xf32, #tpu.memory_space<vmem>>, vector<40x8xf32>
    %cst = arith.constant dense<0.000000e+00> : vector<40x8xf32>
    %2 = tpu.matmul %1, %0, %cst {dimension_numbers = #tpu.dot_dimension_numbers<[1], [0], [0], [1], [0, 0, 1, 1], [], []>} : vector<40x8xf32>, vector<8x8xf32>, vector<40x8xf32> -> vector<40x8xf32>
    %c120 = arith.constant 120 : index
    %c0_3 = arith.constant 0 : index
    %3 = vector.load %arg2[%c120, %c0_3] : memref<240x8xf32, #tpu.memory_space<vmem>>, vector<8x8xf32>
    %4 = vector.extract_strided_slice %2 {offsets = [0, 0], sizes = [8, 8], strides = [1, 1]} : vector<40x8xf32> to vector<8x8xf32>
    %cst_4 = arith.constant 0.000000e+00 : f32
    %5 = vector.broadcast %cst_4 : f32 to vector<8x2xf32>
    %6 = vector.extract_strided_slice %4 {offsets = [0, 0], sizes = [8, 6], strides = [1, 1]} : vector<8x8xf32> to vector<8x6xf32>
    %7 = tpu.concatenate %5, %6 in 1 : vector<8x2xf32>, vector<8x6xf32> -> vector<8x8xf32>
    %8 = vector.extract_strided_slice %2 {offsets = [8, 0], sizes = [8, 8], strides = [1, 1]} : vector<40x8xf32> to vector<8x8xf32>
    %cst_5 = arith.constant 0.000000e+00 : f32
    %9 = vector.broadcast %cst_5 : f32 to vector<8x1xf32>
    %10 = vector.extract_strided_slice %8 {offsets = [0, 0], sizes = [8, 7], strides = [1, 1]} : vector<8x8xf32> to vector<8x7xf32>
    %11 = tpu.concatenate %9, %10 in 1 : vector<8x1xf32>, vector<8x7xf32> -> vector<8x8xf32>
    %12 = vector.extract_strided_slice %2 {offsets = [16, 0], sizes = [8, 8], strides = [1, 1]} : vector<40x8xf32> to vector<8x8xf32>
    %13 = vector.extract_strided_slice %2 {offsets = [24, 0], sizes = [8, 8], strides = [1, 1]} : vector<40x8xf32> to vector<8x8xf32>
    %14 = vector.extract_strided_slice %13 {offsets = [0, 1], sizes = [8, 7], strides = [1, 1]} : vector<8x8xf32> to vector<8x7xf32>
    %cst_6 = arith.constant 0.000000e+00 : f32
    %15 = vector.broadcast %cst_6 : f32 to vector<8x1xf32>
    %16 = tpu.concatenate %14, %15 in 1 : vector<8x7xf32>, vector<8x1xf32> -> vector<8x8xf32>
    %17 = vector.extract_strided_slice %2 {offsets = [32, 0], sizes = [8, 8], strides = [1, 1]} : vector<40x8xf32> to vector<8x8xf32>
    %18 = vector.extract_strided_slice %17 {offsets = [0, 2], sizes = [8, 6], strides = [1, 1]} : vector<8x8xf32> to vector<8x6xf32>
    %cst_7 = arith.constant 0.000000e+00 : f32
    %19 = vector.broadcast %cst_7 : f32 to vector<8x2xf32>
    %20 = tpu.concatenate %18, %19 in 1 : vector<8x6xf32>, vector<8x2xf32> -> vector<8x8xf32>
    %21 = arith.addf %3, %7 : vector<8x8xf32>
    %22 = arith.addf %11, %12 : vector<8x8xf32>
    %23 = arith.addf %16, %20 : vector<8x8xf32>
    %24 = arith.addf %21, %22 : vector<8x8xf32>
    %25 = arith.addf %24, %23 : vector<8x8xf32>
    %c40 = arith.constant 40 : index
    %c0_8 = arith.constant 0 : index
    %26 = vector.load %arg2[%c40, %c0_8] : memref<240x8xf32, #tpu.memory_space<vmem>>, vector<40x8xf32>
    %cst_9 = arith.constant dense<0.000000e+00> : vector<40x8xf32>
    %27 = tpu.matmul %26, %25, %cst_9 {dimension_numbers = #tpu.dot_dimension_numbers<[1], [0], [0], [1], [0, 0, 1, 1], [], []>} : vector<40x8xf32>, vector<8x8xf32>, vector<40x8xf32> -> vector<40x8xf32>
    %c128 = arith.constant 128 : index
    %c0_10 = arith.constant 0 : index
    %28 = vector.load %arg2[%c128, %c0_10] : memref<240x8xf32, #tpu.memory_space<vmem>>, vector<8x8xf32>
    %29 = vector.extract_strided_slice %27 {offsets = [0, 0], sizes = [8, 8], strides = [1, 1]} : vector<40x8xf32> to vector<8x8xf32>
    %cst_11 = arith.constant 0.000000e+00 : f32
    %30 = vector.broadcast %cst_11 : f32 to vector<8x2xf32>
    %31 = vector.extract_strided_slice %29 {offsets = [0, 0], sizes = [8, 6], strides = [1, 1]} : vector<8x8xf32> to vector<8x6xf32>
    %32 = tpu.concatenate %30, %31 in 1 : vector<8x2xf32>, vector<8x6xf32> -> vector<8x8xf32>
    %33 = vector.extract_strided_slice %27 {offsets = [8, 0], sizes = [8, 8], strides = [1, 1]} : vector<40x8xf32> to vector<8x8xf32>
    %cst_12 = arith.constant 0.000000e+00 : f32
    %34 = vector.broadcast %cst_12 : f32 to vector<8x1xf32>
    %35 = vector.extract_strided_slice %33 {offsets = [0, 0], sizes = [8, 7], strides = [1, 1]} : vector<8x8xf32> to vector<8x7xf32>
    %36 = tpu.concatenate %34, %35 in 1 : vector<8x1xf32>, vector<8x7xf32> -> vector<8x8xf32>
    %37 = vector.extract_strided_slice %27 {offsets = [16, 0], sizes = [8, 8], strides = [1, 1]} : vector<40x8xf32> to vector<8x8xf32>
    %38 = vector.extract_strided_slice %27 {offsets = [24, 0], sizes = [8, 8], strides = [1, 1]} : vector<40x8xf32> to vector<8x8xf32>
    %39 = vector.extract_strided_slice %38 {offsets = [0, 1], sizes = [8, 7], strides = [1, 1]} : vector<8x8xf32> to vector<8x7xf32>
    %cst_13 = arith.constant 0.000000e+00 : f32
    %40 = vector.broadcast %cst_13 : f32 to vector<8x1xf32>
    %41 = tpu.concatenate %39, %40 in 1 : vector<8x7xf32>, vector<8x1xf32> -> vector<8x8xf32>
    %42 = vector.extract_strided_slice %27 {offsets = [32, 0], sizes = [8, 8], strides = [1, 1]} : vector<40x8xf32> to vector<8x8xf32>
    %43 = vector.extract_strided_slice %42 {offsets = [0, 2], sizes = [8, 6], strides = [1, 1]} : vector<8x8xf32> to vector<8x6xf32>
    %cst_14 = arith.constant 0.000000e+00 : f32
    %44 = vector.broadcast %cst_14 : f32 to vector<8x2xf32>
    %45 = tpu.concatenate %43, %44 in 1 : vector<8x6xf32>, vector<8x2xf32> -> vector<8x8xf32>
    %46 = arith.addf %28, %32 : vector<8x8xf32>
    %47 = arith.addf %36, %37 : vector<8x8xf32>
    %48 = arith.addf %41, %45 : vector<8x8xf32>
    %49 = arith.addf %46, %47 : vector<8x8xf32>
    %50 = arith.addf %49, %48 : vector<8x8xf32>
    %c80 = arith.constant 80 : index
    %c0_15 = arith.constant 0 : index
    %51 = vector.load %arg2[%c80, %c0_15] : memref<240x8xf32, #tpu.memory_space<vmem>>, vector<40x8xf32>
    %cst_16 = arith.constant dense<0.000000e+00> : vector<40x8xf32>
    %52 = tpu.matmul %51, %50, %cst_16 {dimension_numbers = #tpu.dot_dimension_numbers<[1], [0], [0], [1], [0, 0, 1, 1], [], []>} : vector<40x8xf32>, vector<8x8xf32>, vector<40x8xf32> -> vector<40x8xf32>
    %c136 = arith.constant 136 : index
    %c0_17 = arith.constant 0 : index
    %53 = vector.load %arg2[%c136, %c0_17] : memref<240x8xf32, #tpu.memory_space<vmem>>, vector<8x8xf32>
    %54 = vector.extract_strided_slice %52 {offsets = [0, 0], sizes = [8, 8], strides = [1, 1]} : vector<40x8xf32> to vector<8x8xf32>
    %cst_18 = arith.constant 0.000000e+00 : f32
    %55 = vector.broadcast %cst_18 : f32 to vector<8x2xf32>
    %56 = vector.extract_strided_slice %54 {offsets = [0, 0], sizes = [8, 6], strides = [1, 1]} : vector<8x8xf32> to vector<8x6xf32>
    %57 = tpu.concatenate %55, %56 in 1 : vector<8x2xf32>, vector<8x6xf32> -> vector<8x8xf32>
    %58 = vector.extract_strided_slice %52 {offsets = [8, 0], sizes = [8, 8], strides = [1, 1]} : vector<40x8xf32> to vector<8x8xf32>
    %cst_19 = arith.constant 0.000000e+00 : f32
    %59 = vector.broadcast %cst_19 : f32 to vector<8x1xf32>
    %60 = vector.extract_strided_slice %58 {offsets = [0, 0], sizes = [8, 7], strides = [1, 1]} : vector<8x8xf32> to vector<8x7xf32>
    %61 = tpu.concatenate %59, %60 in 1 : vector<8x1xf32>, vector<8x7xf32> -> vector<8x8xf32>
    %62 = vector.extract_strided_slice %52 {offsets = [16, 0], sizes = [8, 8], strides = [1, 1]} : vector<40x8xf32> to vector<8x8xf32>
    %63 = vector.extract_strided_slice %52 {offsets = [24, 0], sizes = [8, 8], strides = [1, 1]} : vector<40x8xf32> to vector<8x8xf32>
    %64 = vector.extract_strided_slice %63 {offsets = [0, 1], sizes = [8, 7], strides = [1, 1]} : vector<8x8xf32> to vector<8x7xf32>
    %cst_20 = arith.constant 0.000000e+00 : f32
    %65 = vector.broadcast %cst_20 : f32 to vector<8x1xf32>
    %66 = tpu.concatenate %64, %65 in 1 : vector<8x7xf32>, vector<8x1xf32> -> vector<8x8xf32>
    %67 = vector.extract_strided_slice %52 {offsets = [32, 0], sizes = [8, 8], strides = [1, 1]} : vector<40x8xf32> to vector<8x8xf32>
    %68 = vector.extract_strided_slice %67 {offsets = [0, 2], sizes = [8, 6], strides = [1, 1]} : vector<8x8xf32> to vector<8x6xf32>
    %cst_21 = arith.constant 0.000000e+00 : f32
    %69 = vector.broadcast %cst_21 : f32 to vector<8x2xf32>
    %70 = tpu.concatenate %68, %69 in 1 : vector<8x6xf32>, vector<8x2xf32> -> vector<8x8xf32>
    %71 = arith.addf %53, %57 : vector<8x8xf32>
    %72 = arith.addf %61, %62 : vector<8x8xf32>
    %73 = arith.addf %66, %70 : vector<8x8xf32>
    %74 = arith.addf %71, %72 : vector<8x8xf32>
    %75 = arith.addf %74, %73 : vector<8x8xf32>
    %c144 = arith.constant 144 : index
    %c0_22 = arith.constant 0 : index
    %76 = vector.load %arg2[%c144, %c0_22] : memref<240x8xf32, #tpu.memory_space<vmem>>, vector<48x8xf32>
    %c192 = arith.constant 192 : index
    %c0_23 = arith.constant 0 : index
    %77 = vector.load %arg2[%c192, %c0_23] : memref<240x8xf32, #tpu.memory_space<vmem>>, vector<48x8xf32>
    %cst_24 = arith.constant dense<0.000000e+00> : vector<48x8xf32>
    %78 = tpu.matmul %76, %75, %cst_24 {dimension_numbers = #tpu.dot_dimension_numbers<[1], [0], [0], [1], [0, 0, 1, 1], [], []>} : vector<48x8xf32>, vector<8x8xf32>, vector<48x8xf32> -> vector<48x8xf32>
    %79 = arith.mulf %78, %77 : vector<48x8xf32>
    %cst_25 = arith.constant dense<0.000000e+00> : vector<48xf32>
    %80 = vector.multi_reduction <add>, %79, %cst_25 [1] : vector<48x8xf32> to vector<48xf32>
    %81 = vector.shape_cast %80 : vector<48xf32> to vector<48x1xf32>
    %c88 = arith.constant 88 : index
    %c0_26 = arith.constant 0 : index
    %82 = vector.load %arg3[%c88, %c0_26] : memref<200x256xf32, #tpu.memory_space<vmem>>, vector<48x256xf32>
    %c136_27 = arith.constant 136 : index
    %c0_28 = arith.constant 0 : index
    %83 = vector.load %arg3[%c136_27, %c0_28] : memref<200x256xf32, #tpu.memory_space<vmem>>, vector<18x48xf32>
    %c64 = arith.constant 64 : index
    %c0_29 = arith.constant 0 : index
    %84 = vector.load %arg3[%c64, %c0_29] : memref<200x256xf32, #tpu.memory_space<vmem>>, vector<1x256xf32>
    %85 = vector.broadcast %81 : vector<48x1xf32> to vector<48x256xf32>
    %86 = arith.mulf %85, %82 : vector<48x256xf32>
    %cst_30 = arith.constant dense<0.000000e+00> : vector<18x256xf32>
    %87 = tpu.matmul %83, %86, %cst_30 {dimension_numbers = #tpu.dot_dimension_numbers<[1], [0], [0], [1], [0, 0, 1, 1], [], []>} : vector<18x48xf32>, vector<48x256xf32>, vector<18x256xf32> -> vector<18x256xf32>
    %88 = vector.broadcast %84 : vector<1x256xf32> to vector<18x256xf32>
    %89 = arith.addf %87, %88 : vector<18x256xf32>
    %c0_31 = arith.constant 0 : index
    %c0_32 = arith.constant 0 : index
    %90 = vector.load %arg3[%c0_31, %c0_32] : memref<200x256xf32, #tpu.memory_space<vmem>>, vector<64x256xf32>
    %c72 = arith.constant 72 : index
    %c0_33 = arith.constant 0 : index
    %91 = vector.load %arg3[%c72, %c0_33] : memref<200x256xf32, #tpu.memory_space<vmem>>, vector<1x256xf32>
    %c80_34 = arith.constant 80 : index
    %c0_35 = arith.constant 0 : index
    %92 = vector.load %arg3[%c80_34, %c0_35] : memref<200x256xf32, #tpu.memory_space<vmem>>, vector<1x256xf32>
    %93 = tpu.iota {dimensions = array<i32: 1>} : vector<1x64xi32>
    %c32_i32 = arith.constant 32 : i32
    %94 = vector.broadcast %c32_i32 : i32 to vector<1x64xi32>
    %95 = arith.cmpi slt, %93, %94 : vector<1x64xi32>
    %96 = arith.extui %95 : vector<1x64xi1> to vector<1x64xi32>
    %97 = arith.sitofp %96 : vector<1x64xi32> to vector<1x64xf32>
    %cst_36 = arith.constant 0.000000e+00 : f32
    %98 = vector.broadcast %cst_36 : f32 to vector<2x64xf32>
    %cst_37 = arith.constant 0.000000e+00 : f32
    %99 = vector.broadcast %cst_37 : f32 to vector<2x64xf32>
    %100 = vector.extract_strided_slice %89 {offsets = [0, 0], sizes = [2, 256], strides = [1, 1]} : vector<18x256xf32> to vector<2x256xf32>
    %101 = vector.broadcast %91 : vector<1x256xf32> to vector<2x256xf32>
    %102 = arith.mulf %100, %101 : vector<2x256xf32>
    %103 = math.tanh %102 : vector<2x256xf32>
    %104 = vector.broadcast %91 : vector<1x256xf32> to vector<2x256xf32>
    %105 = arith.mulf %103, %104 : vector<2x256xf32>
    %106 = vector.broadcast %92 : vector<1x256xf32> to vector<2x256xf32>
    %107 = arith.addf %105, %106 : vector<2x256xf32>
    %108 = vector.extract_strided_slice %107 {offsets = [0, 0], sizes = [2, 64], strides = [1, 1]} : vector<2x256xf32> to vector<2x64xf32>
    %109 = vector.extract_strided_slice %107 {offsets = [0, 64], sizes = [2, 64], strides = [1, 1]} : vector<2x256xf32> to vector<2x64xf32>
    %110 = vector.extract_strided_slice %107 {offsets = [0, 128], sizes = [2, 64], strides = [1, 1]} : vector<2x256xf32> to vector<2x64xf32>
    %111 = vector.extract_strided_slice %107 {offsets = [0, 192], sizes = [2, 64], strides = [1, 1]} : vector<2x256xf32> to vector<2x64xf32>
    %112 = arith.mulf %109, %98 : vector<2x64xf32>
    %113 = arith.mulf %108, %110 : vector<2x64xf32>
    %114 = arith.addf %112, %113 : vector<2x64xf32>
    %115 = math.tanh %114 : vector<2x64xf32>
    %116 = arith.mulf %111, %115 : vector<2x64xf32>
    %117 = vector.broadcast %97 : vector<1x64xf32> to vector<2x64xf32>
    %118 = arith.mulf %114, %117 : vector<2x64xf32>
    %119 = vector.broadcast %97 : vector<1x64xf32> to vector<2x64xf32>
    %120 = arith.mulf %116, %119 : vector<2x64xf32>
    %121 = vector.extract_strided_slice %89 {offsets = [2, 0], sizes = [2, 256], strides = [1, 1]} : vector<18x256xf32> to vector<2x256xf32>
    %cst_38 = arith.constant dense<0.000000e+00> : vector<2x256xf32>
    %122 = tpu.matmul %120, %90, %cst_38 {dimension_numbers = #tpu.dot_dimension_numbers<[1], [0], [0], [1], [0, 0, 1, 1], [], []>} : vector<2x64xf32>, vector<64x256xf32>, vector<2x256xf32> -> vector<2x256xf32>
    %123 = arith.addf %121, %122 : vector<2x256xf32>
    %124 = vector.broadcast %91 : vector<1x256xf32> to vector<2x256xf32>
    %125 = arith.mulf %123, %124 : vector<2x256xf32>
    %126 = math.tanh %125 : vector<2x256xf32>
    %127 = vector.broadcast %91 : vector<1x256xf32> to vector<2x256xf32>
    %128 = arith.mulf %126, %127 : vector<2x256xf32>
    %129 = vector.broadcast %92 : vector<1x256xf32> to vector<2x256xf32>
    %130 = arith.addf %128, %129 : vector<2x256xf32>
    %131 = vector.extract_strided_slice %130 {offsets = [0, 0], sizes = [2, 64], strides = [1, 1]} : vector<2x256xf32> to vector<2x64xf32>
    %132 = vector.extract_strided_slice %130 {offsets = [0, 64], sizes = [2, 64], strides = [1, 1]} : vector<2x256xf32> to vector<2x64xf32>
    %133 = vector.extract_strided_slice %130 {offsets = [0, 128], sizes = [2, 64], strides = [1, 1]} : vector<2x256xf32> to vector<2x64xf32>
    %134 = vector.extract_strided_slice %130 {offsets = [0, 192], sizes = [2, 64], strides = [1, 1]} : vector<2x256xf32> to vector<2x64xf32>
    %135 = arith.mulf %132, %118 : vector<2x64xf32>
    %136 = arith.mulf %131, %133 : vector<2x64xf32>
    %137 = arith.addf %135, %136 : vector<2x64xf32>
    %138 = math.tanh %137 : vector<2x64xf32>
    %139 = arith.mulf %134, %138 : vector<2x64xf32>
    %c0_39 = arith.constant 0 : index
    %c0_40 = arith.constant 0 : index
    %c0_41 = arith.constant 0 : index
    %140 = vector.load %arg1[%c0_39, %c0_40, %c0_41] : memref<8x2x1xf32, #tpu.memory_space<vmem>>, vector<1x2x1xf32>
    %141 = vector.shape_cast %140 : vector<1x2x1xf32> to vector<2x1xf32>
    %142 = vector.broadcast %141 : vector<2x1xf32> to vector<2x64xf32>
    %143 = arith.mulf %142, %139 : vector<2x64xf32>
    %144 = arith.addf %99, %143 : vector<2x64xf32>
    %145 = vector.extract_strided_slice %89 {offsets = [4, 0], sizes = [2, 256], strides = [1, 1]} : vector<18x256xf32> to vector<2x256xf32>
    %cst_42 = arith.constant dense<0.000000e+00> : vector<2x256xf32>
    %146 = tpu.matmul %139, %90, %cst_42 {dimension_numbers = #tpu.dot_dimension_numbers<[1], [0], [0], [1], [0, 0, 1, 1], [], []>} : vector<2x64xf32>, vector<64x256xf32>, vector<2x256xf32> -> vector<2x256xf32>
    %147 = arith.addf %145, %146 : vector<2x256xf32>
    %148 = vector.broadcast %91 : vector<1x256xf32> to vector<2x256xf32>
    %149 = arith.mulf %147, %148 : vector<2x256xf32>
    %150 = math.tanh %149 : vector<2x256xf32>
    %151 = vector.broadcast %91 : vector<1x256xf32> to vector<2x256xf32>
    %152 = arith.mulf %150, %151 : vector<2x256xf32>
    %153 = vector.broadcast %92 : vector<1x256xf32> to vector<2x256xf32>
    %154 = arith.addf %152, %153 : vector<2x256xf32>
    %155 = vector.extract_strided_slice %154 {offsets = [0, 0], sizes = [2, 64], strides = [1, 1]} : vector<2x256xf32> to vector<2x64xf32>
    %156 = vector.extract_strided_slice %154 {offsets = [0, 64], sizes = [2, 64], strides = [1, 1]} : vector<2x256xf32> to vector<2x64xf32>
    %157 = vector.extract_strided_slice %154 {offsets = [0, 128], sizes = [2, 64], strides = [1, 1]} : vector<2x256xf32> to vector<2x64xf32>
    %158 = vector.extract_strided_slice %154 {offsets = [0, 192], sizes = [2, 64], strides = [1, 1]} : vector<2x256xf32> to vector<2x64xf32>
    %159 = arith.mulf %156, %137 : vector<2x64xf32>
    %160 = arith.mulf %155, %157 : vector<2x64xf32>
    %161 = arith.addf %159, %160 : vector<2x64xf32>
    %162 = math.tanh %161 : vector<2x64xf32>
    %163 = arith.mulf %158, %162 : vector<2x64xf32>
    %c1 = arith.constant 1 : index
    %c0_43 = arith.constant 0 : index
    %c0_44 = arith.constant 0 : index
    %164 = vector.load %arg1[%c1, %c0_43, %c0_44] : memref<8x2x1xf32, #tpu.memory_space<vmem>>, vector<1x2x1xf32>
    %165 = vector.shape_cast %164 : vector<1x2x1xf32> to vector<2x1xf32>
    %166 = vector.broadcast %165 : vector<2x1xf32> to vector<2x64xf32>
    %167 = arith.mulf %166, %163 : vector<2x64xf32>
    %168 = arith.addf %144, %167 : vector<2x64xf32>
    %169 = vector.extract_strided_slice %89 {offsets = [6, 0], sizes = [2, 256], strides = [1, 1]} : vector<18x256xf32> to vector<2x256xf32>
    %cst_45 = arith.constant dense<0.000000e+00> : vector<2x256xf32>
    %170 = tpu.matmul %163, %90, %cst_45 {dimension_numbers = #tpu.dot_dimension_numbers<[1], [0], [0], [1], [0, 0, 1, 1], [], []>} : vector<2x64xf32>, vector<64x256xf32>, vector<2x256xf32> -> vector<2x256xf32>
    %171 = arith.addf %169, %170 : vector<2x256xf32>
    %172 = vector.broadcast %91 : vector<1x256xf32> to vector<2x256xf32>
    %173 = arith.mulf %171, %172 : vector<2x256xf32>
    %174 = math.tanh %173 : vector<2x256xf32>
    %175 = vector.broadcast %91 : vector<1x256xf32> to vector<2x256xf32>
    %176 = arith.mulf %174, %175 : vector<2x256xf32>
    %177 = vector.broadcast %92 : vector<1x256xf32> to vector<2x256xf32>
    %178 = arith.addf %176, %177 : vector<2x256xf32>
    %179 = vector.extract_strided_slice %178 {offsets = [0, 0], sizes = [2, 64], strides = [1, 1]} : vector<2x256xf32> to vector<2x64xf32>
    %180 = vector.extract_strided_slice %178 {offsets = [0, 64], sizes = [2, 64], strides = [1, 1]} : vector<2x256xf32> to vector<2x64xf32>
    %181 = vector.extract_strided_slice %178 {offsets = [0, 128], sizes = [2, 64], strides = [1, 1]} : vector<2x256xf32> to vector<2x64xf32>
    %182 = vector.extract_strided_slice %178 {offsets = [0, 192], sizes = [2, 64], strides = [1, 1]} : vector<2x256xf32> to vector<2x64xf32>
    %183 = arith.mulf %180, %161 : vector<2x64xf32>
    %184 = arith.mulf %179, %181 : vector<2x64xf32>
    %185 = arith.addf %183, %184 : vector<2x64xf32>
    %186 = math.tanh %185 : vector<2x64xf32>
    %187 = arith.mulf %182, %186 : vector<2x64xf32>
    %c2 = arith.constant 2 : index
    %c0_46 = arith.constant 0 : index
    %c0_47 = arith.constant 0 : index
    %188 = vector.load %arg1[%c2, %c0_46, %c0_47] : memref<8x2x1xf32, #tpu.memory_space<vmem>>, vector<1x2x1xf32>
    %189 = vector.shape_cast %188 : vector<1x2x1xf32> to vector<2x1xf32>
    %190 = vector.broadcast %189 : vector<2x1xf32> to vector<2x64xf32>
    %191 = arith.mulf %190, %187 : vector<2x64xf32>
    %192 = arith.addf %168, %191 : vector<2x64xf32>
    %193 = vector.extract_strided_slice %89 {offsets = [8, 0], sizes = [2, 256], strides = [1, 1]} : vector<18x256xf32> to vector<2x256xf32>
    %cst_48 = arith.constant dense<0.000000e+00> : vector<2x256xf32>
    %194 = tpu.matmul %187, %90, %cst_48 {dimension_numbers = #tpu.dot_dimension_numbers<[1], [0], [0], [1], [0, 0, 1, 1], [], []>} : vector<2x64xf32>, vector<64x256xf32>, vector<2x256xf32> -> vector<2x256xf32>
    %195 = arith.addf %193, %194 : vector<2x256xf32>
    %196 = vector.broadcast %91 : vector<1x256xf32> to vector<2x256xf32>
    %197 = arith.mulf %195, %196 : vector<2x256xf32>
    %198 = math.tanh %197 : vector<2x256xf32>
    %199 = vector.broadcast %91 : vector<1x256xf32> to vector<2x256xf32>
    %200 = arith.mulf %198, %199 : vector<2x256xf32>
    %201 = vector.broadcast %92 : vector<1x256xf32> to vector<2x256xf32>
    %202 = arith.addf %200, %201 : vector<2x256xf32>
    %203 = vector.extract_strided_slice %202 {offsets = [0, 0], sizes = [2, 64], strides = [1, 1]} : vector<2x256xf32> to vector<2x64xf32>
    %204 = vector.extract_strided_slice %202 {offsets = [0, 64], sizes = [2, 64], strides = [1, 1]} : vector<2x256xf32> to vector<2x64xf32>
    %205 = vector.extract_strided_slice %202 {offsets = [0, 128], sizes = [2, 64], strides = [1, 1]} : vector<2x256xf32> to vector<2x64xf32>
    %206 = vector.extract_strided_slice %202 {offsets = [0, 192], sizes = [2, 64], strides = [1, 1]} : vector<2x256xf32> to vector<2x64xf32>
    %207 = arith.mulf %204, %185 : vector<2x64xf32>
    %208 = arith.mulf %203, %205 : vector<2x64xf32>
    %209 = arith.addf %207, %208 : vector<2x64xf32>
    %210 = math.tanh %209 : vector<2x64xf32>
    %211 = arith.mulf %206, %210 : vector<2x64xf32>
    %c3 = arith.constant 3 : index
    %c0_49 = arith.constant 0 : index
    %c0_50 = arith.constant 0 : index
    %212 = vector.load %arg1[%c3, %c0_49, %c0_50] : memref<8x2x1xf32, #tpu.memory_space<vmem>>, vector<1x2x1xf32>
    %213 = vector.shape_cast %212 : vector<1x2x1xf32> to vector<2x1xf32>
    %214 = vector.broadcast %213 : vector<2x1xf32> to vector<2x64xf32>
    %215 = arith.mulf %214, %211 : vector<2x64xf32>
    %216 = arith.addf %192, %215 : vector<2x64xf32>
    %217 = vector.extract_strided_slice %89 {offsets = [10, 0], sizes = [2, 256], strides = [1, 1]} : vector<18x256xf32> to vector<2x256xf32>
    %cst_51 = arith.constant dense<0.000000e+00> : vector<2x256xf32>
    %218 = tpu.matmul %211, %90, %cst_51 {dimension_numbers = #tpu.dot_dimension_numbers<[1], [0], [0], [1], [0, 0, 1, 1], [], []>} : vector<2x64xf32>, vector<64x256xf32>, vector<2x256xf32> -> vector<2x256xf32>
    %219 = arith.addf %217, %218 : vector<2x256xf32>
    %220 = vector.broadcast %91 : vector<1x256xf32> to vector<2x256xf32>
    %221 = arith.mulf %219, %220 : vector<2x256xf32>
    %222 = math.tanh %221 : vector<2x256xf32>
    %223 = vector.broadcast %91 : vector<1x256xf32> to vector<2x256xf32>
    %224 = arith.mulf %222, %223 : vector<2x256xf32>
    %225 = vector.broadcast %92 : vector<1x256xf32> to vector<2x256xf32>
    %226 = arith.addf %224, %225 : vector<2x256xf32>
    %227 = vector.extract_strided_slice %226 {offsets = [0, 0], sizes = [2, 64], strides = [1, 1]} : vector<2x256xf32> to vector<2x64xf32>
    %228 = vector.extract_strided_slice %226 {offsets = [0, 64], sizes = [2, 64], strides = [1, 1]} : vector<2x256xf32> to vector<2x64xf32>
    %229 = vector.extract_strided_slice %226 {offsets = [0, 128], sizes = [2, 64], strides = [1, 1]} : vector<2x256xf32> to vector<2x64xf32>
    %230 = vector.extract_strided_slice %226 {offsets = [0, 192], sizes = [2, 64], strides = [1, 1]} : vector<2x256xf32> to vector<2x64xf32>
    %231 = arith.mulf %228, %209 : vector<2x64xf32>
    %232 = arith.mulf %227, %229 : vector<2x64xf32>
    %233 = arith.addf %231, %232 : vector<2x64xf32>
    %234 = math.tanh %233 : vector<2x64xf32>
    %235 = arith.mulf %230, %234 : vector<2x64xf32>
    %c4 = arith.constant 4 : index
    %c0_52 = arith.constant 0 : index
    %c0_53 = arith.constant 0 : index
    %236 = vector.load %arg1[%c4, %c0_52, %c0_53] : memref<8x2x1xf32, #tpu.memory_space<vmem>>, vector<1x2x1xf32>
    %237 = vector.shape_cast %236 : vector<1x2x1xf32> to vector<2x1xf32>
    %238 = vector.broadcast %237 : vector<2x1xf32> to vector<2x64xf32>
    %239 = arith.mulf %238, %235 : vector<2x64xf32>
    %240 = arith.addf %216, %239 : vector<2x64xf32>
    %241 = vector.extract_strided_slice %89 {offsets = [12, 0], sizes = [2, 256], strides = [1, 1]} : vector<18x256xf32> to vector<2x256xf32>
    %cst_54 = arith.constant dense<0.000000e+00> : vector<2x256xf32>
    %242 = tpu.matmul %235, %90, %cst_54 {dimension_numbers = #tpu.dot_dimension_numbers<[1], [0], [0], [1], [0, 0, 1, 1], [], []>} : vector<2x64xf32>, vector<64x256xf32>, vector<2x256xf32> -> vector<2x256xf32>
    %243 = arith.addf %241, %242 : vector<2x256xf32>
    %244 = vector.broadcast %91 : vector<1x256xf32> to vector<2x256xf32>
    %245 = arith.mulf %243, %244 : vector<2x256xf32>
    %246 = math.tanh %245 : vector<2x256xf32>
    %247 = vector.broadcast %91 : vector<1x256xf32> to vector<2x256xf32>
    %248 = arith.mulf %246, %247 : vector<2x256xf32>
    %249 = vector.broadcast %92 : vector<1x256xf32> to vector<2x256xf32>
    %250 = arith.addf %248, %249 : vector<2x256xf32>
    %251 = vector.extract_strided_slice %250 {offsets = [0, 0], sizes = [2, 64], strides = [1, 1]} : vector<2x256xf32> to vector<2x64xf32>
    %252 = vector.extract_strided_slice %250 {offsets = [0, 64], sizes = [2, 64], strides = [1, 1]} : vector<2x256xf32> to vector<2x64xf32>
    %253 = vector.extract_strided_slice %250 {offsets = [0, 128], sizes = [2, 64], strides = [1, 1]} : vector<2x256xf32> to vector<2x64xf32>
    %254 = vector.extract_strided_slice %250 {offsets = [0, 192], sizes = [2, 64], strides = [1, 1]} : vector<2x256xf32> to vector<2x64xf32>
    %255 = arith.mulf %252, %233 : vector<2x64xf32>
    %256 = arith.mulf %251, %253 : vector<2x64xf32>
    %257 = arith.addf %255, %256 : vector<2x64xf32>
    %258 = math.tanh %257 : vector<2x64xf32>
    %259 = arith.mulf %254, %258 : vector<2x64xf32>
    %c5 = arith.constant 5 : index
    %c0_55 = arith.constant 0 : index
    %c0_56 = arith.constant 0 : index
    %260 = vector.load %arg1[%c5, %c0_55, %c0_56] : memref<8x2x1xf32, #tpu.memory_space<vmem>>, vector<1x2x1xf32>
    %261 = vector.shape_cast %260 : vector<1x2x1xf32> to vector<2x1xf32>
    %262 = vector.broadcast %261 : vector<2x1xf32> to vector<2x64xf32>
    %263 = arith.mulf %262, %259 : vector<2x64xf32>
    %264 = arith.addf %240, %263 : vector<2x64xf32>
    %265 = vector.extract_strided_slice %89 {offsets = [14, 0], sizes = [2, 256], strides = [1, 1]} : vector<18x256xf32> to vector<2x256xf32>
    %cst_57 = arith.constant dense<0.000000e+00> : vector<2x256xf32>
    %266 = tpu.matmul %259, %90, %cst_57 {dimension_numbers = #tpu.dot_dimension_numbers<[1], [0], [0], [1], [0, 0, 1, 1], [], []>} : vector<2x64xf32>, vector<64x256xf32>, vector<2x256xf32> -> vector<2x256xf32>
    %267 = arith.addf %265, %266 : vector<2x256xf32>
    %268 = vector.broadcast %91 : vector<1x256xf32> to vector<2x256xf32>
    %269 = arith.mulf %267, %268 : vector<2x256xf32>
    %270 = math.tanh %269 : vector<2x256xf32>
    %271 = vector.broadcast %91 : vector<1x256xf32> to vector<2x256xf32>
    %272 = arith.mulf %270, %271 : vector<2x256xf32>
    %273 = vector.broadcast %92 : vector<1x256xf32> to vector<2x256xf32>
    %274 = arith.addf %272, %273 : vector<2x256xf32>
    %275 = vector.extract_strided_slice %274 {offsets = [0, 0], sizes = [2, 64], strides = [1, 1]} : vector<2x256xf32> to vector<2x64xf32>
    %276 = vector.extract_strided_slice %274 {offsets = [0, 64], sizes = [2, 64], strides = [1, 1]} : vector<2x256xf32> to vector<2x64xf32>
    %277 = vector.extract_strided_slice %274 {offsets = [0, 128], sizes = [2, 64], strides = [1, 1]} : vector<2x256xf32> to vector<2x64xf32>
    %278 = vector.extract_strided_slice %274 {offsets = [0, 192], sizes = [2, 64], strides = [1, 1]} : vector<2x256xf32> to vector<2x64xf32>
    %279 = arith.mulf %276, %257 : vector<2x64xf32>
    %280 = arith.mulf %275, %277 : vector<2x64xf32>
    %281 = arith.addf %279, %280 : vector<2x64xf32>
    %282 = math.tanh %281 : vector<2x64xf32>
    %283 = arith.mulf %278, %282 : vector<2x64xf32>
    %c6 = arith.constant 6 : index
    %c0_58 = arith.constant 0 : index
    %c0_59 = arith.constant 0 : index
    %284 = vector.load %arg1[%c6, %c0_58, %c0_59] : memref<8x2x1xf32, #tpu.memory_space<vmem>>, vector<1x2x1xf32>
    %285 = vector.shape_cast %284 : vector<1x2x1xf32> to vector<2x1xf32>
    %286 = vector.broadcast %285 : vector<2x1xf32> to vector<2x64xf32>
    %287 = arith.mulf %286, %283 : vector<2x64xf32>
    %288 = arith.addf %264, %287 : vector<2x64xf32>
    %289 = vector.extract_strided_slice %89 {offsets = [16, 0], sizes = [2, 256], strides = [1, 1]} : vector<18x256xf32> to vector<2x256xf32>
    %cst_60 = arith.constant dense<0.000000e+00> : vector<2x256xf32>
    %290 = tpu.matmul %283, %90, %cst_60 {dimension_numbers = #tpu.dot_dimension_numbers<[1], [0], [0], [1], [0, 0, 1, 1], [], []>} : vector<2x64xf32>, vector<64x256xf32>, vector<2x256xf32> -> vector<2x256xf32>
    %291 = arith.addf %289, %290 : vector<2x256xf32>
    %292 = vector.broadcast %91 : vector<1x256xf32> to vector<2x256xf32>
    %293 = arith.mulf %291, %292 : vector<2x256xf32>
    %294 = math.tanh %293 : vector<2x256xf32>
    %295 = vector.broadcast %91 : vector<1x256xf32> to vector<2x256xf32>
    %296 = arith.mulf %294, %295 : vector<2x256xf32>
    %297 = vector.broadcast %92 : vector<1x256xf32> to vector<2x256xf32>
    %298 = arith.addf %296, %297 : vector<2x256xf32>
    %299 = vector.extract_strided_slice %298 {offsets = [0, 0], sizes = [2, 64], strides = [1, 1]} : vector<2x256xf32> to vector<2x64xf32>
    %300 = vector.extract_strided_slice %298 {offsets = [0, 64], sizes = [2, 64], strides = [1, 1]} : vector<2x256xf32> to vector<2x64xf32>
    %301 = vector.extract_strided_slice %298 {offsets = [0, 128], sizes = [2, 64], strides = [1, 1]} : vector<2x256xf32> to vector<2x64xf32>
    %302 = vector.extract_strided_slice %298 {offsets = [0, 192], sizes = [2, 64], strides = [1, 1]} : vector<2x256xf32> to vector<2x64xf32>
    %303 = arith.mulf %300, %281 : vector<2x64xf32>
    %304 = arith.mulf %299, %301 : vector<2x64xf32>
    %305 = arith.addf %303, %304 : vector<2x64xf32>
    %306 = math.tanh %305 : vector<2x64xf32>
    %307 = arith.mulf %302, %306 : vector<2x64xf32>
    %c7 = arith.constant 7 : index
    %c0_61 = arith.constant 0 : index
    %c0_62 = arith.constant 0 : index
    %308 = vector.load %arg1[%c7, %c0_61, %c0_62] : memref<8x2x1xf32, #tpu.memory_space<vmem>>, vector<1x2x1xf32>
    %309 = vector.shape_cast %308 : vector<1x2x1xf32> to vector<2x1xf32>
    %310 = vector.broadcast %309 : vector<2x1xf32> to vector<2x64xf32>
    %311 = arith.mulf %310, %307 : vector<2x64xf32>
    %312 = arith.addf %288, %311 : vector<2x64xf32>
    %313 = vector.extract_strided_slice %312 {offsets = [0, 32], sizes = [2, 32], strides = [1, 1]} : vector<2x64xf32> to vector<2x32xf32>
    %c160 = arith.constant 160 : index
    %c0_63 = arith.constant 0 : index
    %314 = vector.load %arg3[%c160, %c0_63] : memref<200x256xf32, #tpu.memory_space<vmem>>, vector<32x32xf32>
    %c192_64 = arith.constant 192 : index
    %c0_65 = arith.constant 0 : index
    %315 = vector.load %arg3[%c192_64, %c0_65] : memref<200x256xf32, #tpu.memory_space<vmem>>, vector<1x32xf32>
    %cst_66 = arith.constant dense<0.000000e+00> : vector<2x32xf32>
    %316 = tpu.matmul %313, %314, %cst_66 {dimension_numbers = #tpu.dot_dimension_numbers<[1], [0], [0], [1], [0, 0, 1, 1], [], []>} : vector<2x32xf32>, vector<32x32xf32>, vector<2x32xf32> -> vector<2x32xf32>
    %317 = vector.broadcast %315 : vector<1x32xf32> to vector<2x32xf32>
    %318 = arith.addf %316, %317 : vector<2x32xf32>
    %cst_67 = arith.constant 0.000000e+00 : f32
    %319 = vector.broadcast %cst_67 : f32 to vector<2x32xf32>
    %320 = arith.maximumf %318, %319 : vector<2x32xf32>
    %c0_68 = arith.constant 0 : index
    %c0_69 = arith.constant 0 : index
    %321 = vector.load %arg4[%c0_68, %c0_69] : memref<2x32xf32, #tpu.memory_space<vmem>>, vector<2x32xf32>
    tpu.vector_store %arg4[%c0_68, %c0_69], %320 {strides = array<i32>} : memref<2x32xf32, #tpu.memory_space<vmem>>, vector<2x32xf32>,
    return
  }
}

</mosaic_0001>

<llo_original>
// kernel: forward.1
$region0: #{forward.1}
  #allocation0 [shape = 'u32[]', space=smem, size = 0x4, offset = 0x4, fixed_abs, tag = 'smem constant byte address 0x4 - core index']
  #allocation1 [shape = 'u32[144,128]{1,0:T(1,128)}', space=vmem, size = 0x12000, scoped, tag = 'internal scratch']
  %s0 = inlined_call_operand.vmem [shape: f32[8,8], index: 0, kind: input, shape index: {}]
  %s1 = inlined_call_operand.vmem [shape: f32[8,2,1], index: 1, kind: input, shape index: {}]
  %s2 = inlined_call_operand.vmem [shape: f32[240,8], index: 2, kind: input, shape index: {}]
  %s3 = inlined_call_operand.hbm [shape: f32[200,256], index: 3, kind: input, shape index: {}]
  %s4 = inlined_call_operand.hbm [shape: f32[2,32], index: 4, kind: output, shape index: {}]
  %s5 = sld [smem:[#allocation0]]
  $region30: #{forward.1} parent=0
    _
  %s7 = ssub.s32 1, %s5
  %s8 = scalar_select 0, %s7, %s5
  $region1: #{forward.1} parent=0
    #allocation2 [shape = 'u8[204800]{0}', space=vmem, size = 0x32000, scoped, tag = 'input window, operand 3, single buffered']
    #allocation3 [shape = 's32[1]{0}', space=sflag, size = 0x4, scoped, tag = 'scoped memory for forward.1']
    #allocation4 [shape = 's32[1]{0}', space=sflag, size = 0x4, scoped, tag = 'scoped memory for forward.1']
    #allocation5 [shape = 'u8[1024]{0}', space=vmem, size = 0x400, scoped, tag = 'output window, operand 0, single buffered']
    %9 = vsyncpa [#allocation3], 0
    %10 = vsyncpa [#allocation4], 0
    // Predicated region
    $region2: #{forward.1} parent=1 // pred_check
      _
    $region3: #{forward.1} parent=1 // pred_check_branch
      %12 = sbr.rel (0) target = $region5
    $region4: #{forward.1} parent=1 // pred_region
      _
    $region5: #{forward.1} parent=1 // pred_fallthru
      _
    // Predicated region
    $region6: #{forward.1} parent=1 // pred_check
      _
    $region7: #{forward.1} parent=1 // pred_check_branch
      %14 = sbr.rel (0) target = $region9
    $region8: #{forward.1} parent=1 // pred_region
      _
    $region9: #{forward.1} parent=1 // pred_fallthru
      _
    // Predicated region
    $region10: #{forward.1} parent=1 // pred_check
      _
    $region11: #{forward.1} parent=1 // pred_check_branch
      %16 = sbr.rel (0) target = $region13
    $region12: #{forward.1} parent=1 // pred_region
      _
    $region13: #{forward.1} parent=1 // pred_fallthru
      _
    // Predicated region
    $region14: #{forward.1} parent=1 // pred_check
      _
    $region15: #{forward.1} parent=1 // pred_check_branch
      %18 = sbr.rel (0) target = $region17
    $region16: #{forward.1} parent=1 // pred_region
      %s20 = ssub.s32 6400, 6400
      %21 = vsyncadd [#allocation3], %s20
      %s22 = sshll.u32 [#allocation2], 4
      %s23 = int_to_ptr.vmem [resolvable:$true] %s22
      %28 = dma.hbm_to_vmem [thread:$0]  %s3, 6400, %s23, [#allocation3], 256, 256, 16
    $region17: #{forward.1} parent=1 // pred_fallthru
      _
    // Predicated region
    $region18: #{forward.1} parent=1 // pred_check
      _
    $region19: #{forward.1} parent=1 // pred_check_branch
      %30 = sbr.rel (0) target = $region21
    $region20: #{forward.1} parent=1 // pred_region
      %31 = dma.done [#allocation3], 6400
    $region21: #{forward.1} parent=1 // pred_fallthru
      _
    %v32 = vld [vmem:[%s0] sm:$0xff]
    %v33 = vld [vmem:[%s2] sm:$0xff]
    %v34 = vld [vmem:[%s2 + $0x8] sm:$0xff]
    %v35 = vld [vmem:[%s2 + $0x10] sm:$0xff]
    %v36 = vld [vmem:[%s2 + $0x18] sm:$0xff]
    %v37 = vld [vmem:[%s2 + $0x20] sm:$0xff]
    %vm38 = vcmask 64512
    %v40 = vsel %vm38, %v33, 0
    %v43 = vsel %vm38, %v34, 0
    %v46 = vsel %vm38, %v35, 0
    %v49 = vsel %vm38, %v36, 0
    %v52 = vsel %vm38, %v37, 0
    %54 = vmatprep.subr.mxu0 0.0
    %55 = vmatpush1.msra.mxu0 %v32
    %56 = vmatprep.subr.mxu0 0.0
    %57 = vmatpush1.msra.mxu0 0.0
    %58 = vmatprep.subr.mxu0 0.0
    %59 = vmatpush1.msra.mxu0 0.0
    %60 = vmatprep.subr.mxu0 0.0
    %61 = vmatpush1.msra.mxu0 0.0
    %62 = vmatprep.subr.mxu0 0.0
    %63 = vmatpush1.msra.mxu0 0.0
    %64 = vmatprep.subr.mxu0 0.0
    %65 = vmatpush1.msra.mxu0 0.0
    %66 = vmatprep.subr.mxu0 0.0
    %67 = vmatpush1.msra.mxu0 0.0
    %68 = vmatprep.subr.mxu0 0.0
    %69 = vmatpush1.msra.mxu0 0.0
    %70 = vmatprep.subr.mxu0 0.0
    %71 = vmatpush1.msra.mxu0 0.0
    %72 = vmatprep.subr.mxu0 0.0
    %73 = vmatpush1.msra.mxu0 0.0
    %74 = vmatprep.subr.mxu0 0.0
    %75 = vmatpush1.msra.mxu0 0.0
    %76 = vmatprep.subr.mxu0 0.0
    %77 = vmatpush1.msra.mxu0 0.0
    %78 = vmatprep.subr.mxu0 0.0
    %79 = vmatpush1.msra.mxu0 0.0
    %80 = vmatprep.subr.mxu0 0.0
    %81 = vmatpush1.msra.mxu0 0.0
    %82 = vmatprep.subr.mxu0 0.0
    %83 = vmatpush1.msra.mxu0 0.0
    %84 = vmatprep.subr.mxu0 0.0
    %85 = vmatpush1.msra.mxu0 0.0
    %86 = vmatprep.subr.mxu0 0.0
    %87 = vmatpush1.msra.mxu0 0.0
    %88 = vmatprep.subr.mxu0 0.0
    %89 = vmatpush1.msra.mxu0 0.0
    %90 = vmatprep.subr.mxu0 0.0
    %91 = vmatpush1.msra.mxu0 0.0
    %92 = vmatprep.subr.mxu0 0.0
    %93 = vmatpush1.msra.mxu0 0.0
    %94 = vmatprep.subr.mxu0 0.0
    %95 = vmatpush1.msra.mxu0 0.0
    %96 = vmatprep.subr.mxu0 0.0
    %97 = vmatpush1.msra.mxu0 0.0
    %98 = vmatprep.subr.mxu0 0.0
    %99 = vmatpush1.msra.mxu0 0.0
    %100 = vmatprep.subr.mxu0 0.0
    %101 = vmatpush1.msra.mxu0 0.0
    %102 = vmatprep.subr.mxu0 0.0
    %103 = vmatpush1.msra.mxu0 0.0
    %104 = vmatprep.subr.mxu0 0.0
    %105 = vmatpush1.msra.mxu0 0.0
    %106 = vmatprep.subr.mxu0 0.0
    %107 = vmatpush1.msra.mxu0 0.0
    %108 = vmatprep.subr.mxu0 0.0
    %109 = vmatpush1.msra.mxu0 0.0
    %110 = vmatprep.subr.mxu0 0.0
    %111 = vmatpush1.msra.mxu0 0.0
    %112 = vmatprep.subr.mxu0 0.0
    %113 = vmatpush1.msra.mxu0 0.0
    %114 = vmatprep.subr.mxu0 0.0
    %115 = vmatpush1.msra.mxu0 0.0
    %116 = vmatprep.subr.mxu0 0.0
    %117 = vmatpush1.msra.mxu0 0.0
    %118 = vmatprep.mubr.f32.mxu0 0.0
    %119 = vmatmul.mubr.f32.gmra.mrb[0].mxu0 %v40
    %v120 = vpop.f32.mrb[0].mxu0
    %v121 = vadd.f32 0.0, %v120
    %v122 = vpop.f32.mrb[0].mxu0
    %123 = vmatprep.mubr.f32.mxu0 0.0
    %124 = vmatmul.mubr.f32.gmra.mrb[0].mxu0 %v43
    %v125 = vpop.f32.mrb[0].mxu0
    %v126 = vadd.f32 0.0, %v125
    %v127 = vpop.f32.mrb[0].mxu0
    %128 = vmatprep.mubr.f32.mxu0 0.0
    %129 = vmatmul.mubr.f32.gmra.mrb[0].mxu0 %v46
    %v130 = vpop.f32.mrb[0].mxu0
    %v131 = vadd.f32 0.0, %v130
    %v132 = vpop.f32.mrb[0].mxu0
    %133 = vmatprep.mubr.f32.mxu0 0.0
    %134 = vmatmul.mubr.f32.gmra.mrb[0].mxu0 %v49
    %v135 = vpop.f32.mrb[0].mxu0
    %v136 = vadd.f32 0.0, %v135
    %v137 = vpop.f32.mrb[0].mxu0
    %138 = vmatprep.mubr.f32.mxu0 0.0
    %139 = vmatmul.mubr.f32.gmra.mrb[0].mxu0 %v52
    %v140 = vpop.f32.mrb[0].mxu0
    %v141 = vadd.f32 0.0, %v140
    %v142 = vpop.f32.mrb[0].mxu0
    %143 = vdwg.mxu0
    %v144 = vld [vmem:[%s2 + $0x78] sm:$0xff]
    %146 = vrot.lane.b32.xlu0 %v121, 2
    %v147 = vpop.permute.xlu0 %146
    %vm149 = vcmask 15360
    %v150 = vsel %vm149, 0.0, %v147
    %152 = vrot.lane.b32.xlu0 %v126, 1
    %v153 = vpop.permute.xlu0 %152
    %vm155 = vcmask 7168
    %v156 = vsel %vm155, 0.0, %v153
    %158 = vrot.lane.b32.xlu0 %v136, 127
    %v159 = vpop.permute.xlu0 %158
    %vm161 = vcmask 56320
    %v162 = vsel %vm161, %v159, 0.0
    %164 = vrot.lane.b32.xlu0 %v141, 126
    %v165 = vpop.permute.xlu0 %164
    %vm167 = vcmask 48128
    %v168 = vsel %vm167, %v165, 0.0
    %v169 = vadd.f32 %v144, %v150
    %v170 = vadd.f32 %v156, %v131
    %v171 = vadd.f32 %v162, %v168
    %v172 = vadd.f32 %v169, %v170
    %v173 = vadd.f32 %v172, %v171
    %v174 = vld [vmem:[%s2 + $0x28] sm:$0xff]
    %v175 = vld [vmem:[%s2 + $0x30] sm:$0xff]
    %v176 = vld [vmem:[%s2 + $0x38] sm:$0xff]
    %v177 = vld [vmem:[%s2 + $0x40] sm:$0xff]
    %v178 = vld [vmem:[%s2 + $0x48] sm:$0xff]
    %v180 = vsel %vm38, %v174, 0
    %v183 = vsel %vm38, %v175, 0
    %v186 = vsel %vm38, %v176, 0
    %v189 = vsel %vm38, %v177, 0
    %v192 = vsel %vm38, %v178, 0
    %194 = vmatprep.subr.mxu0 0.0
    %195 = vmatpush1.msra.mxu0 %v173
    %196 = vmatprep.subr.mxu0 0.0
    %197 = vmatpush1.msra.mxu0 0.0
    %198 = vmatprep.subr.mxu0 0.0
    %199 = vmatpush1.msra.mxu0 0.0
    %200 = vmatprep.subr.mxu0 0.0
    %201 = vmatpush1.msra.mxu0 0.0
    %202 = vmatprep.subr.mxu0 0.0
    %203 = vmatpush1.msra.mxu0 0.0
    %204 = vmatprep.subr.mxu0 0.0
    %205 = vmatpush1.msra.mxu0 0.0
    %206 = vmatprep.subr.mxu0 0.0
    %207 = vmatpush1.msra.mxu0 0.0
    %208 = vmatprep.subr.mxu0 0.0
    %209 = vmatpush1.msra.mxu0 0.0
    %210 = vmatprep.subr.mxu0 0.0
    %211 = vmatpush1.msra.mxu0 0.0
    %212 = vmatprep.subr.mxu0 0.0
    %213 = vmatpush1.msra.mxu0 0.0
    %214 = vmatprep.subr.mxu0 0.0
    %215 = vmatpush1.msra.mxu0 0.0
    %216 = vmatprep.subr.mxu0 0.0
    %217 = vmatpush1.msra.mxu0 0.0
    %218 = vmatprep.subr.mxu0 0.0
    %219 = vmatpush1.msra.mxu0 0.0
    %220 = vmatprep.subr.mxu0 0.0
    %221 = vmatpush1.msra.mxu0 0.0
    %222 = vmatprep.subr.mxu0 0.0
    %223 = vmatpush1.msra.mxu0 0.0
    %224 = vmatprep.subr.mxu0 0.0
    %225 = vmatpush1.msra.mxu0 0.0
    %226 = vmatprep.subr.mxu0 0.0
    %227 = vmatpush1.msra.mxu0 0.0
    %228 = vmatprep.subr.mxu0 0.0
    %229 = vmatpush1.msra.mxu0 0.0
    %230 = vmatprep.subr.mxu0 0.0
    %231 = vmatpush1.msra.mxu0 0.0
    %232 = vmatprep.subr.mxu0 0.0
    %233 = vmatpush1.msra.mxu0 0.0
    %234 = vmatprep.subr.mxu0 0.0
    %235 = vmatpush1.msra.mxu0 0.0
    %236 = vmatprep.subr.mxu0 0.0
    %237 = vmatpush1.msra.mxu0 0.0
    %238 = vmatprep.subr.mxu0 0.0
    %239 = vmatpush1.msra.mxu0 0.0
    %240 = vmatprep.subr.mxu0 0.0
    %241 = vmatpush1.msra.mxu0 0.0
    %242 = vmatprep.subr.mxu0 0.0
    %243 = vmatpush1.msra.mxu0 0.0
    %244 = vmatprep.subr.mxu0 0.0
    %245 = vmatpush1.msra.mxu0 0.0
    %246 = vmatprep.subr.mxu0 0.0
    %247 = vmatpush1.msra.mxu0 0.0
    %248 = vmatprep.subr.mxu0 0.0
    %249 = vmatpush1.msra.mxu0 0.0
    %250 = vmatprep.subr.mxu0 0.0
    %251 = vmatpush1.msra.mxu0 0.0
    %252 = vmatprep.subr.mxu0 0.0
    %253 = vmatpush1.msra.mxu0 0.0
    %254 = vmatprep.subr.mxu0 0.0
    %255 = vmatpush1.msra.mxu0 0.0
    %256 = vmatprep.subr.mxu0 0.0
    %257 = vmatpush1.msra.mxu0 0.0
    %258 = vmatprep.mubr.f32.mxu0 0.0
    %259 = vmatmul.mubr.f32.gmra.mrb[0].mxu0 %v180
    %v260 = vpop.f32.mrb[0].mxu0
    %v261 = vadd.f32 0.0, %v260
    %v262 = vpop.f32.mrb[0].mxu0
    %263 = vmatprep.mubr.f32.mxu0 0.0
    %264 = vmatmul.mubr.f32.gmra.mrb[0].mxu0 %v183
    %v265 = vpop.f32.mrb[0].mxu0
    %v266 = vadd.f32 0.0, %v265
    %v267 = vpop.f32.mrb[0].mxu0
    %268 = vmatprep.mubr.f32.mxu0 0.0
    %269 = vmatmul.mubr.f32.gmra.mrb[0].mxu0 %v186
    %v270 = vpop.f32.mrb[0].mxu0
    %v271 = vadd.f32 0.0, %v270
    %v272 = vpop.f32.mrb[0].mxu0
    %273 = vmatprep.mubr.f32.mxu0 0.0
    %274 = vmatmul.mubr.f32.gmra.mrb[0].mxu0 %v189
    %v275 = vpop.f32.mrb[0].mxu0
    %v276 = vadd.f32 0.0, %v275
    %v277 = vpop.f32.mrb[0].mxu0
    %278 = vmatprep.mubr.f32.mxu0 0.0
    %279 = vmatmul.mubr.f32.gmra.mrb[0].mxu0 %v192
    %v280 = vpop.f32.mrb[0].mxu0
    %v281 = vadd.f32 0.0, %v280
    %v282 = vpop.f32.mrb[0].mxu0
    %283 = vdwg.mxu0
    %v284 = vld [vmem:[%s2 + $0x80] sm:$0xff]
    %286 = vrot.lane.b32.xlu0 %v261, 2
    %v287 = vpop.permute.xlu0 %286
    %v289 = vsel %vm149, 0.0, %v287
    %291 = vrot.lane.b32.xlu0 %v266, 1
    %v292 = vpop.permute.xlu0 %291
    %v294 = vsel %vm155, 0.0, %v292
    %296 = vrot.lane.b32.xlu0 %v276, 127
    %v297 = vpop.permute.xlu0 %296
    %v299 = vsel %vm161, %v297, 0.0
    %301 = vrot.lane.b32.xlu0 %v281, 126
    %v302 = vpop.permute.xlu0 %301
    %v304 = vsel %vm167, %v302, 0.0
    %v305 = vadd.f32 %v284, %v289
    %v306 = vadd.f32 %v294, %v271
    %v307 = vadd.f32 %v299, %v304
    %v308 = vadd.f32 %v305, %v306
    %v309 = vadd.f32 %v308, %v307
    %v310 = vld [vmem:[%s2 + $0x50] sm:$0xff]
    %v311 = vld [vmem:[%s2 + $0x58] sm:$0xff]
    %v312 = vld [vmem:[%s2 + $0x60] sm:$0xff]
    %v313 = vld [vmem:[%s2 + $0x68] sm:$0xff]
    %v314 = vld [vmem:[%s2 + $0x70] sm:$0xff]
    %v316 = vsel %vm38, %v310, 0
    %v319 = vsel %vm38, %v311, 0
    %v322 = vsel %vm38, %v312, 0
    %v325 = vsel %vm38, %v313, 0
    %v328 = vsel %vm38, %v314, 0
    %330 = vmatprep.subr.mxu0 0.0
    %331 = vmatpush1.msra.mxu0 %v309
    %332 = vmatprep.subr.mxu0 0.0
    %333 = vmatpush1.msra.mxu0 0.0
    %334 = vmatprep.subr.mxu0 0.0
    %335 = vmatpush1.msra.mxu0 0.0
    %336 = vmatprep.subr.mxu0 0.0
    %337 = vmatpush1.msra.mxu0 0.0
    %338 = vmatprep.subr.mxu0 0.0
    %339 = vmatpush1.msra.mxu0 0.0
    %340 = vmatprep.subr.mxu0 0.0
    %341 = vmatpush1.msra.mxu0 0.0
    %342 = vmatprep.subr.mxu0 0.0
    %343 = vmatpush1.msra.mxu0 0.0
    %344 = vmatprep.subr.mxu0 0.0
    %345 = vmatpush1.msra.mxu0 0.0
    %346 = vmatprep.subr.mxu0 0.0
    %347 = vmatpush1.msra.mxu0 0.0
    %348 = vmatprep.subr.mxu0 0.0
    %349 = vmatpush1.msra.mxu0 0.0
    %350 = vmatprep.subr.mxu0 0.0
    %351 = vmatpush1.msra.mxu0 0.0
    %352 = vmatprep.subr.mxu0 0.0
    %353 = vmatpush1.msra.mxu0 0.0
    %354 = vmatprep.subr.mxu0 0.0
    %355 = vmatpush1.msra.mxu0 0.0
    %356 = vmatprep.subr.mxu0 0.0
    %357 = vmatpush1.msra.mxu0 0.0
    %358 = vmatprep.subr.mxu0 0.0
    %359 = vmatpush1.msra.mxu0 0.0
    %360 = vmatprep.subr.mxu0 0.0
    %361 = vmatpush1.msra.mxu0 0.0
    %362 = vmatprep.subr.mxu0 0.0
    %363 = vmatpush1.msra.mxu0 0.0
    %364 = vmatprep.subr.mxu0 0.0
    %365 = vmatpush1.msra.mxu0 0.0
    %366 = vmatprep.subr.mxu0 0.0
    %367 = vmatpush1.msra.mxu0 0.0
    %368 = vmatprep.subr.mxu0 0.0
    %369 = vmatpush1.msra.mxu0 0.0
    %370 = vmatprep.subr.mxu0 0.0
    %371 = vmatpush1.msra.mxu0 0.0
    %372 = vmatprep.subr.mxu0 0.0
    %373 = vmatpush1.msra.mxu0 0.0
    %374 = vmatprep.subr.mxu0 0.0
    %375 = vmatpush1.msra.mxu0 0.0
    %376 = vmatprep.subr.mxu0 0.0
    %377 = vmatpush1.msra.mxu0 0.0
    %378 = vmatprep.subr.mxu0 0.0
    %379 = vmatpush1.msra.mxu0 0.0
    %380 = vmatprep.subr.mxu0 0.0
    %381 = vmatpush1.msra.mxu0 0.0
    %382 = vmatprep.subr.mxu0 0.0
    %383 = vmatpush1.msra.mxu0 0.0
    %384 = vmatprep.subr.mxu0 0.0
    %385 = vmatpush1.msra.mxu0 0.0
    %386 = vmatprep.subr.mxu0 0.0
    %387 = vmatpush1.msra.mxu0 0.0
    %388 = vmatprep.subr.mxu0 0.0
    %389 = vmatpush1.msra.mxu0 0.0
    %390 = vmatprep.subr.mxu0 0.0
    %391 = vmatpush1.msra.mxu0 0.0
    %392 = vmatprep.subr.mxu0 0.0
    %393 = vmatpush1.msra.mxu0 0.0
    %394 = vmatprep.mubr.f32.mxu0 0.0
    %395 = vmatmul.mubr.f32.gmra.mrb[0].mxu0 %v316
    %v396 = vpop.f32.mrb[0].mxu0
    %v397 = vadd.f32 0.0, %v396
    %v398 = vpop.f32.mrb[0].mxu0
    %399 = vmatprep.mubr.f32.mxu0 0.0
    %400 = vmatmul.mubr.f32.gmra.mrb[0].mxu0 %v319
    %v401 = vpop.f32.mrb[0].mxu0
    %v402 = vadd.f32 0.0, %v401
    %v403 = vpop.f32.mrb[0].mxu0
    %404 = vmatprep.mubr.f32.mxu0 0.0
    %405 = vmatmul.mubr.f32.gmra.mrb[0].mxu0 %v322
    %v406 = vpop.f32.mrb[0].mxu0
    %v407 = vadd.f32 0.0, %v406
    %v408 = vpop.f32.mrb[0].mxu0
    %409 = vmatprep.mubr.f32.mxu0 0.0
    %410 = vmatmul.mubr.f32.gmra.mrb[0].mxu0 %v325
    %v411 = vpop.f32.mrb[0].mxu0
    %v412 = vadd.f32 0.0, %v411
    %v413 = vpop.f32.mrb[0].mxu0
    %414 = vmatprep.mubr.f32.mxu0 0.0
    %415 = vmatmul.mubr.f32.gmra.mrb[0].mxu0 %v328
    %v416 = vpop.f32.mrb[0].mxu0
    %v417 = vadd.f32 0.0, %v416
    %v418 = vpop.f32.mrb[0].mxu0
    %419 = vdwg.mxu0
    %v420 = vld [vmem:[%s2 + $0x88] sm:$0xff]
    %422 = vrot.lane.b32.xlu0 %v397, 2
    %v423 = vpop.permute.xlu0 %422
    %v425 = vsel %vm149, 0.0, %v423
    %427 = vrot.lane.b32.xlu0 %v402, 1
    %v428 = vpop.permute.xlu0 %427
    %v430 = vsel %vm155, 0.0, %v428
    %432 = vrot.lane.b32.xlu0 %v412, 127
    %v433 = vpop.permute.xlu0 %432
    %v435 = vsel %vm161, %v433, 0.0
    %437 = vrot.lane.b32.xlu0 %v417, 126
    %v438 = vpop.permute.xlu0 %437
    %v440 = vsel %vm167, %v438, 0.0
    %v441 = vadd.f32 %v420, %v425
    %v442 = vadd.f32 %v430, %v407
    %v443 = vadd.f32 %v435, %v440
    %v444 = vadd.f32 %v441, %v442
    %v445 = vadd.f32 %v444, %v443
    %v446 = vld [vmem:[%s2 + $0x90] sm:$0xff]
    %v447 = vld [vmem:[%s2 + $0x98] sm:$0xff]
    %v448 = vld [vmem:[%s2 + $0xa0] sm:$0xff]
    %v449 = vld [vmem:[%s2 + $0xa8] sm:$0xff]
    %v450 = vld [vmem:[%s2 + $0xb0] sm:$0xff]
    %v451 = vld [vmem:[%s2 + $0xb8] sm:$0xff]
    %v452 = vld [vmem:[%s2 + $0xc0] sm:$0xff]
    %v453 = vld [vmem:[%s2 + $0xc8] sm:$0xff]
    %v454 = vld [vmem:[%s2 + $0xd0] sm:$0xff]
    %v455 = vld [vmem:[%s2 + $0xd8] sm:$0xff]
    %v456 = vld [vmem:[%s2 + $0xe0] sm:$0xff]
    %v457 = vld [vmem:[%s2 + $0xe8] sm:$0xff]
    %v459 = vsel %vm38, %v446, 0
    %v462 = vsel %vm38, %v447, 0
    %v465 = vsel %vm38, %v448, 0
    %v468 = vsel %vm38, %v449, 0
    %v471 = vsel %vm38, %v450, 0
    %v474 = vsel %vm38, %v451, 0
    %476 = vmatprep.subr.mxu0 0.0
    %477 = vmatpush1.msra.mxu0 %v445
    %478 = vmatprep.subr.mxu0 0.0
    %479 = vmatpush1.msra.mxu0 0.0
    %480 = vmatprep.subr.mxu0 0.0
    %481 = vmatpush1.msra.mxu0 0.0
    %482 = vmatprep.subr.mxu0 0.0
    %483 = vmatpush1.msra.mxu0 0.0
    %484 = vmatprep.subr.mxu0 0.0
    %485 = vmatpush1.msra.mxu0 0.0
    %486 = vmatprep.subr.mxu0 0.0
    %487 = vmatpush1.msra.mxu0 0.0
    %488 = vmatprep.subr.mxu0 0.0
    %489 = vmatpush1.msra.mxu0 0.0
    %490 = vmatprep.subr.mxu0 0.0
    %491 = vmatpush1.msra.mxu0 0.0
    %492 = vmatprep.subr.mxu0 0.0
    %493 = vmatpush1.msra.mxu0 0.0
    %494 = vmatprep.subr.mxu0 0.0
    %495 = vmatpush1.msra.mxu0 0.0
    %496 = vmatprep.subr.mxu0 0.0
    %497 = vmatpush1.msra.mxu0 0.0
    %498 = vmatprep.subr.mxu0 0.0
    %499 = vmatpush1.msra.mxu0 0.0
    %500 = vmatprep.subr.mxu0 0.0
    %501 = vmatpush1.msra.mxu0 0.0
    %502 = vmatprep.subr.mxu0 0.0
    %503 = vmatpush1.msra.mxu0 0.0
    %504 = vmatprep.subr.mxu0 0.0
    %505 = vmatpush1.msra.mxu0 0.0
    %506 = vmatprep.subr.mxu0 0.0
    %507 = vmatpush1.msra.mxu0 0.0
    %508 = vmatprep.subr.mxu0 0.0
    %509 = vmatpush1.msra.mxu0 0.0
    %510 = vmatprep.subr.mxu0 0.0
    %511 = vmatpush1.msra.mxu0 0.0
    %512 = vmatprep.subr.mxu0 0.0
    %513 = vmatpush1.msra.mxu0 0.0
    %514 = vmatprep.subr.mxu0 0.0
    %515 = vmatpush1.msra.mxu0 0.0
    %516 = vmatprep.subr.mxu0 0.0
    %517 = vmatpush1.msra.mxu0 0.0
    %518 = vmatprep.subr.mxu0 0.0
    %519 = vmatpush1.msra.mxu0 0.0
    %520 = vmatprep.subr.mxu0 0.0
    %521 = vmatpush1.msra.mxu0 0.0
    %522 = vmatprep.subr.mxu0 0.0
    %523 = vmatpush1.msra.mxu0 0.0
    %524 = vmatprep.subr.mxu0 0.0
    %525 = vmatpush1.msra.mxu0 0.0
    %526 = vmatprep.subr.mxu0 0.0
    %527 = vmatpush1.msra.mxu0 0.0
    %528 = vmatprep.subr.mxu0 0.0
    %529 = vmatpush1.msra.mxu0 0.0
    %530 = vmatprep.subr.mxu0 0.0
    %531 = vmatpush1.msra.mxu0 0.0
    %532 = vmatprep.subr.mxu0 0.0
    %533 = vmatpush1.msra.mxu0 0.0
    %534 = vmatprep.subr.mxu0 0.0
    %535 = vmatpush1.msra.mxu0 0.0
    %536 = vmatprep.subr.mxu0 0.0
    %537 = vmatpush1.msra.mxu0 0.0
    %538 = vmatprep.subr.mxu0 0.0
    %539 = vmatpush1.msra.mxu0 0.0
    %540 = vmatprep.mubr.f32.mxu0 0.0
    %541 = vmatmul.mubr.f32.gmra.mrb[0].mxu0 %v459
    %v542 = vpop.f32.mrb[0].mxu0
    %v543 = vadd.f32 0.0, %v542
    %v544 = vpop.f32.mrb[0].mxu0
    %545 = vmatprep.mubr.f32.mxu0 0.0
    %546 = vmatmul.mubr.f32.gmra.mrb[0].mxu0 %v462
    %v547 = vpop.f32.mrb[0].mxu0
    %v548 = vadd.f32 0.0, %v547
    %v549 = vpop.f32.mrb[0].mxu0
    %550 = vmatprep.mubr.f32.mxu0 0.0
    %551 = vmatmul.mubr.f32.gmra.mrb[0].mxu0 %v465
    %v552 = vpop.f32.mrb[0].mxu0
    %v553 = vadd.f32 0.0, %v552
    %v554 = vpop.f32.mrb[0].mxu0
    %555 = vmatprep.mubr.f32.mxu0 0.0
    %556 = vmatmul.mubr.f32.gmra.mrb[0].mxu0 %v468
    %v557 = vpop.f32.mrb[0].mxu0
    %v558 = vadd.f32 0.0, %v557
    %v559 = vpop.f32.mrb[0].mxu0
    %560 = vmatprep.mubr.f32.mxu0 0.0
    %561 = vmatmul.mubr.f32.gmra.mrb[0].mxu0 %v471
    %v562 = vpop.f32.mrb[0].mxu0
    %v563 = vadd.f32 0.0, %v562
    %v564 = vpop.f32.mrb[0].mxu0
    %565 = vmatprep.mubr.f32.mxu0 0.0
    %566 = vmatmul.mubr.f32.gmra.mrb[0].mxu0 %v474
    %v567 = vpop.f32.mrb[0].mxu0
    %v568 = vadd.f32 0.0, %v567
    %v569 = vpop.f32.mrb[0].mxu0
    %570 = vdwg.mxu0
    %v571 = vmul.f32 %v543, %v452
    %v572 = vmul.f32 %v548, %v453
    %v573 = vmul.f32 %v553, %v454
    %v574 = vmul.f32 %v558, %v455
    %v575 = vmul.f32 %v563, %v456
    %v576 = vmul.f32 %v568, %v457
    %v577 = vsel %vm38, %v571, 0.0
    %578 = vadd.xlane.f32.xlu0 %v577
    %v579 = vpop.xlane.xlu0 %578
    %v580 = vsel %vm38, %v572, 0.0
    %581 = vadd.xlane.f32.xlu0 %v580
    %v582 = vpop.xlane.xlu0 %581
    %v583 = vsel %vm38, %v573, 0.0
    %584 = vadd.xlane.f32.xlu0 %v583
    %v585 = vpop.xlane.xlu0 %584
    %v586 = vsel %vm38, %v574, 0.0
    %587 = vadd.xlane.f32.xlu0 %v586
    %v588 = vpop.xlane.xlu0 %587
    %v589 = vsel %vm38, %v575, 0.0
    %590 = vadd.xlane.f32.xlu0 %v589
    %v591 = vpop.xlane.xlu0 %590
    %v592 = vsel %vm38, %v576, 0.0
    %593 = vadd.xlane.f32.xlu0 %v592
    %v594 = vpop.xlane.xlu0 %593
    %v595 = vld [vmem:[#allocation2 + $0xb0] sm:$0xff]
    %v596 = vld [vmem:[#allocation2 + $0xb8] sm:$0xff]
    %v597 = vld [vmem:[#allocation2 + $0xc0] sm:$0xff]
    %v598 = vld [vmem:[#allocation2 + $0xc8] sm:$0xff]
    %v599 = vld [vmem:[#allocation2 + $0xd0] sm:$0xff]
    %v600 = vld [vmem:[#allocation2 + $0xd8] sm:$0xff]
    %v601 = vld [vmem:[#allocation2 + $0xe0] sm:$0xff]
    %v602 = vld [vmem:[#allocation2 + $0xe8] sm:$0xff]
    %v603 = vld [vmem:[#allocation2 + $0xf0] sm:$0xff]
    %v604 = vld [vmem:[#allocation2 + $0xf8] sm:$0xff]
    %v605 = vld [vmem:[#allocation2 + $0x100] sm:$0xff]
    %v606 = vld [vmem:[#allocation2 + $0x108] sm:$0xff]
    %v607 = vld [vmem:[#allocation2 + $0x110] sm:$0xff]
    %v608 = vld [vmem:[#allocation2 + $0x120] sm:$0xff]
    %v609 = vld [vmem:[#allocation2 + $0x130] sm:$0x3]
    %s610 = scalar_lea.vmem [#allocation2], 128
    %v611 = vld [vmem:[%s610] ss:$8 sm:$0x3]
    %v612 = vmul.f32 %v579, %v595
    %v613 = vmul.f32 %v579, %v596
    %v614 = vmul.f32 %v582, %v597
    %v615 = vmul.f32 %v582, %v598
    %v616 = vmul.f32 %v585, %v599
    %v617 = vmul.f32 %v585, %v600
    %v618 = vmul.f32 %v588, %v601
    %v619 = vmul.f32 %v588, %v602
    %v620 = vmul.f32 %v591, %v603
    %v621 = vmul.f32 %v591, %v604
    %v622 = vmul.f32 %v594, %v605
    %v623 = vmul.f32 %v594, %v606
    %v625 = vlaneseq
    %v626 = vshrl.u32 %v625, 7
    %v627 = vsub.s32 0, %v626
    %v628 = vrot.slane %v611, %v627
    %v629 = vlaneseq
    %v630 = vshrl.u32 %v629, 7
    %v631 = vsub.s32 1, %v630
    %v632 = vrot.slane %v611, %v631
    %vm635 = vcmask 392192
    %v637 = vsel %vm635, %v607, 0
    %v640 = vsel %vm635, %v608, 0
    %v643 = vsel %vm635, %v609, 0
    %645 = vmatprep.subr.mxu0 %v613
    %646 = vmatpush1.msra.mxu0 %v612
    %647 = vmatprep.subr.mxu0 %v615
    %648 = vmatpush1.msra.mxu0 %v614
    %649 = vmatprep.subr.mxu0 %v617
    %650 = vmatpush1.msra.mxu0 %v616
    %651 = vmatprep.subr.mxu0 %v619
    %652 = vmatpush1.msra.mxu0 %v618
    %653 = vmatprep.subr.mxu0 %v621
    %654 = vmatpush1.msra.mxu0 %v620
    %655 = vmatprep.subr.mxu0 %v623
    %656 = vmatpush1.msra.mxu0 %v622
    %657 = vmatprep.subr.mxu0 0.0
    %658 = vmatpush1.msra.mxu0 0.0
    %659 = vmatprep.subr.mxu0 0.0
    %660 = vmatpush1.msra.mxu0 0.0
    %661 = vmatprep.subr.mxu0 0.0
    %662 = vmatpush1.msra.mxu0 0.0
    %663 = vmatprep.subr.mxu0 0.0
    %664 = vmatpush1.msra.mxu0 0.0
    %665 = vmatprep.subr.mxu0 0.0
    %666 = vmatpush1.msra.mxu0 0.0
    %667 = vmatprep.subr.mxu0 0.0
    %668 = vmatpush1.msra.mxu0 0.0
    %669 = vmatprep.subr.mxu0 0.0
    %670 = vmatpush1.msra.mxu0 0.0
    %671 = vmatprep.subr.mxu0 0.0
    %672 = vmatpush1.msra.mxu0 0.0
    %673 = vmatprep.subr.mxu0 0.0
    %674 = vmatpush1.msra.mxu0 0.0
    %675 = vmatprep.subr.mxu0 0.0
    %676 = vmatpush1.msra.mxu0 0.0
    %677 = vmatprep.subr.mxu0 0.0
    %678 = vmatpush1.msra.mxu0 0.0
    %679 = vmatprep.subr.mxu0 0.0
    %680 = vmatpush1.msra.mxu0 0.0
    %681 = vmatprep.subr.mxu0 0.0
    %682 = vmatpush1.msra.mxu0 0.0
    %683 = vmatprep.subr.mxu0 0.0
    %684 = vmatpush1.msra.mxu0 0.0
    %685 = vmatprep.subr.mxu0 0.0
    %686 = vmatpush1.msra.mxu0 0.0
    %687 = vmatprep.subr.mxu0 0.0
    %688 = vmatpush1.msra.mxu0 0.0
    %689 = vmatprep.subr.mxu0 0.0
    %690 = vmatpush1.msra.mxu0 0.0
    %691 = vmatprep.subr.mxu0 0.0
    %692 = vmatpush1.msra.mxu0 0.0
    %693 = vmatprep.subr.mxu0 0.0
    %694 = vmatpush1.msra.mxu0 0.0
    %695 = vmatprep.subr.mxu0 0.0
    %696 = vmatpush1.msra.mxu0 0.0
    %697 = vmatprep.subr.mxu0 0.0
    %698 = vmatpush1.msra.mxu0 0.0
    %699 = vmatprep.subr.mxu0 0.0
    %700 = vmatpush1.msra.mxu0 0.0
    %701 = vmatprep.subr.mxu0 0.0
    %702 = vmatpush1.msra.mxu0 0.0
    %703 = vmatprep.subr.mxu0 0.0
    %704 = vmatpush1.msra.mxu0 0.0
    %705 = vmatprep.subr.mxu0 0.0
    %706 = vmatpush1.msra.mxu0 0.0
    %707 = vmatprep.subr.mxu0 0.0
    %708 = vmatpush1.msra.mxu0 0.0
    %709 = vmatprep.mubr.f32.mxu0 0.0
    %710 = vmatmul.mubr.f32.gmra.mrb[0].mxu0 %v637
    %v711 = vpop.f32.mrb[0].mxu0
    %v712 = vadd.f32 %v628, %v711
    %v713 = vpop.f32.mrb[0].mxu0
    %v714 = vadd.f32 %v632, %v713
    %715 = vmatprep.mubr.f32.mxu0 0.0
    %716 = vmatmul.mubr.f32.gmra.mrb[0].mxu0 %v640
    %v717 = vpop.f32.mrb[0].mxu0
    %v718 = vadd.f32 %v628, %v717
    %v719 = vpop.f32.mrb[0].mxu0
    %v720 = vadd.f32 %v632, %v719
    %721 = vmatprep.mubr.f32.mxu0 0.0
    %722 = vmatmul.mubr.f32.gmra.mrb[0].mxu0 %v643
    %v723 = vpop.f32.mrb[0].mxu0
    %v724 = vadd.f32 %v628, %v723
    %v725 = vpop.f32.mrb[0].mxu0
    %v726 = vadd.f32 %v632, %v725
    %727 = vdwg.mxu0
    %v728 = vld [vmem:[#allocation2] sm:$0xff]
    %v729 = vld [vmem:[#allocation2 + $0x8] sm:$0xff]
    %v730 = vld [vmem:[#allocation2 + $0x10] sm:$0xff]
    %v731 = vld [vmem:[#allocation2 + $0x18] sm:$0xff]
    %v732 = vld [vmem:[#allocation2 + $0x20] sm:$0xff]
    %v733 = vld [vmem:[#allocation2 + $0x28] sm:$0xff]
    %v734 = vld [vmem:[#allocation2 + $0x30] sm:$0xff]
    %v735 = vld [vmem:[#allocation2 + $0x38] sm:$0xff]
    %v736 = vld [vmem:[#allocation2 + $0x40] sm:$0xff]
    %v737 = vld [vmem:[#allocation2 + $0x48] sm:$0xff]
    %v738 = vld [vmem:[#allocation2 + $0x50] sm:$0xff]
    %v739 = vld [vmem:[#allocation2 + $0x58] sm:$0xff]
    %v740 = vld [vmem:[#allocation2 + $0x60] sm:$0xff]
    %v741 = vld [vmem:[#allocation2 + $0x68] sm:$0xff]
    %v742 = vld [vmem:[#allocation2 + $0x70] sm:$0xff]
    %v743 = vld [vmem:[#allocation2 + $0x78] sm:$0xff]
    %s744 = scalar_lea.vmem [#allocation2], 144
    %v745 = vld [vmem:[%s744] ss:$8 sm:$0x3]
    %s746 = scalar_lea.vmem [#allocation2], 160
    %v747 = vld [vmem:[%s746] ss:$8 sm:$0x3]
    %v748 = vlaneseq
    %v749 = vand.u32 %v748, 127
    %vm750 = vcmp.lt.s32.totalorder %v749, 32
    %v751 = vsel %vm750, 1, 0
    %v752 = vcvt.s32.f32 %v751
    %v754 = vlaneseq
    %v755 = vshrl.u32 %v754, 7
    %v756 = vsub.s32 0, %v755
    %v757 = vrot.slane %v745, %v756
    %v758 = vlaneseq
    %v759 = vshrl.u32 %v758, 7
    %v760 = vsub.s32 1, %v759
    %v761 = vrot.slane %v745, %v760
    %v764 = vmul.f32 %v712, %v757
    %v765 = vmul.f32 %v714, %v761
    %v766 = vtanh.pop %v764
    %v767 = vtanh.pop %v765
    %v768 = vmul.f32 %v766, %v757
    %v769 = vmul.f32 %v767, %v761
    %v771 = vlaneseq
    %v772 = vshrl.u32 %v771, 7
    %v773 = vsub.s32 0, %v772
    %v774 = vrot.slane %v747, %v773
    %v775 = vlaneseq
    %v776 = vshrl.u32 %v775, 7
    %v777 = vsub.s32 1, %v776
    %v778 = vrot.slane %v747, %v777
    %v781 = vadd.f32 %v768, %v774
    %v782 = vadd.f32 %v769, %v778
    %v783 = vmul.f32 %v781, 0.0
    %v784 = vmul.f32 %v781, %v782
    %786 = vrot.lane.b32.xlu0 %v784, 64
    %v787 = vpop.permute.xlu0 %786
    %v789 = vadd.f32 %v783, %v787
    %v790 = vtanh.pop %v789
    %v791 = vmul.f32 %v782, %v790
    %793 = vrot.lane.b32.xlu0 %v752, 64
    %v794 = vpop.permute.xlu0 %793
    %v796 = vmul.f32 %v789, %v794
    %v797 = vmul.f32 %v791, %v794
    %799 = vrot.lane.b32.xlu0 %v797, 64
    %v800 = vpop.permute.xlu0 %799
    %vm801 = vcmask 523264
    %v802 = vsel %vm801, %v800, 0
    %804 = vmatprep.subr.mxu0 %v729
    %805 = vmatpush1.msra.mxu0 %v728
    %806 = vmatprep.subr.mxu0 %v731
    %807 = vmatpush1.msra.mxu0 %v730
    %808 = vmatprep.subr.mxu0 %v733
    %809 = vmatpush1.msra.mxu0 %v732
    %810 = vmatprep.subr.mxu0 %v735
    %811 = vmatpush1.msra.mxu0 %v734
    %812 = vmatprep.subr.mxu0 %v737
    %813 = vmatpush1.msra.mxu0 %v736
    %814 = vmatprep.subr.mxu0 %v739
    %815 = vmatpush1.msra.mxu0 %v738
    %816 = vmatprep.subr.mxu0 %v741
    %817 = vmatpush1.msra.mxu0 %v740
    %818 = vmatprep.subr.mxu0 %v743
    %819 = vmatpush1.msra.mxu0 %v742
    %820 = vmatprep.subr.mxu0 0.0
    %821 = vmatpush1.msra.mxu0 0.0
    %822 = vmatprep.subr.mxu0 0.0
    %823 = vmatpush1.msra.mxu0 0.0
    %824 = vmatprep.subr.mxu0 0.0
    %825 = vmatpush1.msra.mxu0 0.0
    %826 = vmatprep.subr.mxu0 0.0
    %827 = vmatpush1.msra.mxu0 0.0
    %828 = vmatprep.subr.mxu0 0.0
    %829 = vmatpush1.msra.mxu0 0.0
    %830 = vmatprep.subr.mxu0 0.0
    %831 = vmatpush1.msra.mxu0 0.0
    %832 = vmatprep.subr.mxu0 0.0
    %833 = vmatpush1.msra.mxu0 0.0
    %834 = vmatprep.subr.mxu0 0.0
    %835 = vmatpush1.msra.mxu0 0.0
    %836 = vmatprep.subr.mxu0 0.0
    %837 = vmatpush1.msra.mxu0 0.0
    %838 = vmatprep.subr.mxu0 0.0
    %839 = vmatpush1.msra.mxu0 0.0
    %840 = vmatprep.subr.mxu0 0.0
    %841 = vmatpush1.msra.mxu0 0.0
    %842 = vmatprep.subr.mxu0 0.0
    %843 = vmatpush1.msra.mxu0 0.0
    %844 = vmatprep.subr.mxu0 0.0
    %845 = vmatpush1.msra.mxu0 0.0
    %846 = vmatprep.subr.mxu0 0.0
    %847 = vmatpush1.msra.mxu0 0.0
    %848 = vmatprep.subr.mxu0 0.0
    %849 = vmatpush1.msra.mxu0 0.0
    %850 = vmatprep.subr.mxu0 0.0
    %851 = vmatpush1.msra.mxu0 0.0
    %852 = vmatprep.subr.mxu0 0.0
    %853 = vmatpush1.msra.mxu0 0.0
    %854 = vmatprep.subr.mxu0 0.0
    %855 = vmatpush1.msra.mxu0 0.0
    %856 = vmatprep.subr.mxu0 0.0
    %857 = vmatpush1.msra.mxu0 0.0
    %858 = vmatprep.subr.mxu0 0.0
    %859 = vmatpush1.msra.mxu0 0.0
    %860 = vmatprep.subr.mxu0 0.0
    %861 = vmatpush1.msra.mxu0 0.0
    %862 = vmatprep.subr.mxu0 0.0
    %863 = vmatpush1.msra.mxu0 0.0
    %864 = vmatprep.subr.mxu0 0.0
    %865 = vmatpush1.msra.mxu0 0.0
    %866 = vmatprep.subr.mxu0 0.0
    %867 = vmatpush1.msra.mxu0 0.0
    %868 = vmatprep.mubr.f32.mxu0 0.0
    %869 = vmatmul.mubr.f32.gmra.mrb[0].mxu0 %v802
    %v870 = vpop.f32.mrb[0].mxu0
    %v871 = vadd.f32 0.0, %v870
    %v872 = vpop.f32.mrb[0].mxu0
    %v873 = vadd.f32 0.0, %v872
    %874 = vdwg.mxu0
    %v877 = vrot.slane %v871, 6
    %v878 = vrot.slane %v873, 6
    %v881 = vadd.f32 %v712, %v877
    %v882 = vadd.f32 %v714, %v878
    %v883 = vmul.f32 %v881, %v757
    %v884 = vmul.f32 %v882, %v761
    %v885 = vtanh.pop %v883
    %v886 = vtanh.pop %v884
    %v887 = vmul.f32 %v885, %v757
    %v888 = vmul.f32 %v886, %v761
    %v889 = vadd.f32 %v887, %v774
    %v890 = vadd.f32 %v888, %v778
    %v892 = vrot.slane %v796, 6
    %v894 = vmul.f32 %v889, %v892
    %v895 = vmul.f32 %v889, %v890
    %897 = vrot.lane.b32.xlu0 %v895, 64
    %v898 = vpop.permute.xlu0 %897
    %v900 = vadd.f32 %v894, %v898
    %v901 = vtanh.pop %v900
    %v902 = vmul.f32 %v890, %v901
    %v903 = vld [vmem:[%s1] sm:$0x3]
    %905 = vset.pattern.permute.xlu0 0
    %906 = vperm.xlu0 %905, %v903
    %v907 = vpop.permute.xlu0 %906
    %v910 = vrot.slane %v902, 2
    %911 = vrot.lane.b32.xlu0 %v910, 64
    %v912 = vpop.permute.xlu0 %911
    %v914 = vmul.f32 %v907, %v912
    %v915 = vadd.f32 %v914, 0.0
    %v916 = vsel %vm801, %v912, 0
    %918 = vmatprep.subr.mxu0 %v729
    %919 = vmatpush1.msra.mxu0 %v728
    %920 = vmatprep.subr.mxu0 %v731
    %921 = vmatpush1.msra.mxu0 %v730
    %922 = vmatprep.subr.mxu0 %v733
    %923 = vmatpush1.msra.mxu0 %v732
    %924 = vmatprep.subr.mxu0 %v735
    %925 = vmatpush1.msra.mxu0 %v734
    %926 = vmatprep.subr.mxu0 %v737
    %927 = vmatpush1.msra.mxu0 %v736
    %928 = vmatprep.subr.mxu0 %v739
    %929 = vmatpush1.msra.mxu0 %v738
    %930 = vmatprep.subr.mxu0 %v741
    %931 = vmatpush1.msra.mxu0 %v740
    %932 = vmatprep.subr.mxu0 %v743
    %933 = vmatpush1.msra.mxu0 %v742
    %934 = vmatprep.subr.mxu0 0.0
    %935 = vmatpush1.msra.mxu0 0.0
    %936 = vmatprep.subr.mxu0 0.0
    %937 = vmatpush1.msra.mxu0 0.0
    %938 = vmatprep.subr.mxu0 0.0
    %939 = vmatpush1.msra.mxu0 0.0
    %940 = vmatprep.subr.mxu0 0.0
    %941 = vmatpush1.msra.mxu0 0.0
    %942 = vmatprep.subr.mxu0 0.0
    %943 = vmatpush1.msra.mxu0 0.0
    %944 = vmatprep.subr.mxu0 0.0
    %945 = vmatpush1.msra.mxu0 0.0
    %946 = vmatprep.subr.mxu0 0.0
    %947 = vmatpush1.msra.mxu0 0.0
    %948 = vmatprep.subr.mxu0 0.0
    %949 = vmatpush1.msra.mxu0 0.0
    %950 = vmatprep.subr.mxu0 0.0
    %951 = vmatpush1.msra.mxu0 0.0
    %952 = vmatprep.subr.mxu0 0.0
    %953 = vmatpush1.msra.mxu0 0.0
    %954 = vmatprep.subr.mxu0 0.0
    %955 = vmatpush1.msra.mxu0 0.0
    %956 = vmatprep.subr.mxu0 0.0
    %957 = vmatpush1.msra.mxu0 0.0
    %958 = vmatprep.subr.mxu0 0.0
    %959 = vmatpush1.msra.mxu0 0.0
    %960 = vmatprep.subr.mxu0 0.0
    %961 = vmatpush1.msra.mxu0 0.0
    %962 = vmatprep.subr.mxu0 0.0
    %963 = vmatpush1.msra.mxu0 0.0
    %964 = vmatprep.subr.mxu0 0.0
    %965 = vmatpush1.msra.mxu0 0.0
    %966 = vmatprep.subr.mxu0 0.0
    %967 = vmatpush1.msra.mxu0 0.0
    %968 = vmatprep.subr.mxu0 0.0
    %969 = vmatpush1.msra.mxu0 0.0
    %970 = vmatprep.subr.mxu0 0.0
    %971 = vmatpush1.msra.mxu0 0.0
    %972 = vmatprep.subr.mxu0 0.0
    %973 = vmatpush1.msra.mxu0 0.0
    %974 = vmatprep.subr.mxu0 0.0
    %975 = vmatpush1.msra.mxu0 0.0
    %976 = vmatprep.subr.mxu0 0.0
    %977 = vmatpush1.msra.mxu0 0.0
    %978 = vmatprep.subr.mxu0 0.0
    %979 = vmatpush1.msra.mxu0 0.0
    %980 = vmatprep.subr.mxu0 0.0
    %981 = vmatpush1.msra.mxu0 0.0
    %982 = vmatprep.mubr.f32.mxu0 0.0
    %983 = vmatmul.mubr.f32.gmra.mrb[0].mxu0 %v916
    %v984 = vpop.f32.mrb[0].mxu0
    %v985 = vadd.f32 0.0, %v984
    %v986 = vpop.f32.mrb[0].mxu0
    %v987 = vadd.f32 0.0, %v986
    %988 = vdwg.mxu0
    %v991 = vrot.slane %v985, 4
    %v992 = vrot.slane %v987, 4
    %v995 = vadd.f32 %v712, %v991
    %v996 = vadd.f32 %v714, %v992
    %v997 = vmul.f32 %v995, %v757
    %v998 = vmul.f32 %v996, %v761
    %v999 = vtanh.pop %v997
    %v1000 = vtanh.pop %v998
    %v1001 = vmul.f32 %v999, %v757
    %v1002 = vmul.f32 %v1000, %v761
    %v1003 = vadd.f32 %v1001, %v774
    %v1004 = vadd.f32 %v1002, %v778
    %v1006 = vrot.slane %v900, 6
    %v1008 = vmul.f32 %v1003, %v1006
    %v1009 = vmul.f32 %v1003, %v1004
    %1011 = vrot.lane.b32.xlu0 %v1009, 64
    %v1012 = vpop.permute.xlu0 %1011
    %v1014 = vadd.f32 %v1008, %v1012
    %v1015 = vtanh.pop %v1014
    %v1016 = vmul.f32 %v1004, %v1015
    %s1017 = scalar_lea.vmem %s1, 2
    %v1018 = vld [vmem:[%s1017] sm:$0x3]
    %1020 = vset.pattern.permute.xlu0 0
    %1021 = vperm.xlu0 %1020, %v1018
    %v1022 = vpop.permute.xlu0 %1021
    %v1025 = vrot.slane %v1016, 4
    %1026 = vrot.lane.b32.xlu0 %v1025, 64
    %v1027 = vpop.permute.xlu0 %1026
    %v1029 = vmul.f32 %v1022, %v1027
    %v1030 = vadd.f32 %v915, %v1029
    %v1031 = vsel %vm801, %v1027, 0
    %1033 = vmatprep.subr.mxu0 %v729
    %1034 = vmatpush1.msra.mxu0 %v728
    %1035 = vmatprep.subr.mxu0 %v731
    %1036 = vmatpush1.msra.mxu0 %v730
    %1037 = vmatprep.subr.mxu0 %v733
    %1038 = vmatpush1.msra.mxu0 %v732
    %1039 = vmatprep.subr.mxu0 %v735
    %1040 = vmatpush1.msra.mxu0 %v734
    %1041 = vmatprep.subr.mxu0 %v737
    %1042 = vmatpush1.msra.mxu0 %v736
    %1043 = vmatprep.subr.mxu0 %v739
    %1044 = vmatpush1.msra.mxu0 %v738
    %1045 = vmatprep.subr.mxu0 %v741
    %1046 = vmatpush1.msra.mxu0 %v740
    %1047 = vmatprep.subr.mxu0 %v743
    %1048 = vmatpush1.msra.mxu0 %v742
    %1049 = vmatprep.subr.mxu0 0.0
    %1050 = vmatpush1.msra.mxu0 0.0
    %1051 = vmatprep.subr.mxu0 0.0
    %1052 = vmatpush1.msra.mxu0 0.0
    %1053 = vmatprep.subr.mxu0 0.0
    %1054 = vmatpush1.msra.mxu0 0.0
    %1055 = vmatprep.subr.mxu0 0.0
    %1056 = vmatpush1.msra.mxu0 0.0
    %1057 = vmatprep.subr.mxu0 0.0
    %1058 = vmatpush1.msra.mxu0 0.0
    %1059 = vmatprep.subr.mxu0 0.0
    %1060 = vmatpush1.msra.mxu0 0.0
    %1061 = vmatprep.subr.mxu0 0.0
    %1062 = vmatpush1.msra.mxu0 0.0
    %1063 = vmatprep.subr.mxu0 0.0
    %1064 = vmatpush1.msra.mxu0 0.0
    %1065 = vmatprep.subr.mxu0 0.0
    %1066 = vmatpush1.msra.mxu0 0.0
    %1067 = vmatprep.subr.mxu0 0.0
    %1068 = vmatpush1.msra.mxu0 0.0
    %1069 = vmatprep.subr.mxu0 0.0
    %1070 = vmatpush1.msra.mxu0 0.0
    %1071 = vmatprep.subr.mxu0 0.0
    %1072 = vmatpush1.msra.mxu0 0.0
    %1073 = vmatprep.subr.mxu0 0.0
    %1074 = vmatpush1.msra.mxu0 0.0
    %1075 = vmatprep.subr.mxu0 0.0
    %1076 = vmatpush1.msra.mxu0 0.0
    %1077 = vmatprep.subr.mxu0 0.0
    %1078 = vmatpush1.msra.mxu0 0.0
    %1079 = vmatprep.subr.mxu0 0.0
    %1080 = vmatpush1.msra.mxu0 0.0
    %1081 = vmatprep.subr.mxu0 0.0
    %1082 = vmatpush1.msra.mxu0 0.0
    %1083 = vmatprep.subr.mxu0 0.0
    %1084 = vmatpush1.msra.mxu0 0.0
    %1085 = vmatprep.subr.mxu0 0.0
    %1086 = vmatpush1.msra.mxu0 0.0
    %1087 = vmatprep.subr.mxu0 0.0
    %1088 = vmatpush1.msra.mxu0 0.0
    %1089 = vmatprep.subr.mxu0 0.0
    %1090 = vmatpush1.msra.mxu0 0.0
    %1091 = vmatprep.subr.mxu0 0.0
    %1092 = vmatpush1.msra.mxu0 0.0
    %1093 = vmatprep.subr.mxu0 0.0
    %1094 = vmatpush1.msra.mxu0 0.0
    %1095 = vmatprep.subr.mxu0 0.0
    %1096 = vmatpush1.msra.mxu0 0.0
    %1097 = vmatprep.mubr.f32.mxu0 0.0
    %1098 = vmatmul.mubr.f32.gmra.mrb[0].mxu0 %v1031
    %v1099 = vpop.f32.mrb[0].mxu0
    %v1100 = vadd.f32 0.0, %v1099
    %v1101 = vpop.f32.mrb[0].mxu0
    %v1102 = vadd.f32 0.0, %v1101
    %1103 = vdwg.mxu0
    %v1106 = vrot.slane %v1100, 2
    %v1107 = vrot.slane %v1102, 2
    %v1110 = vadd.f32 %v712, %v1106
    %v1111 = vadd.f32 %v714, %v1107
    %v1112 = vmul.f32 %v1110, %v757
    %v1113 = vmul.f32 %v1111, %v761
    %v1114 = vtanh.pop %v1112
    %v1115 = vtanh.pop %v1113
    %v1116 = vmul.f32 %v1114, %v757
    %v1117 = vmul.f32 %v1115, %v761
    %v1118 = vadd.f32 %v1116, %v774
    %v1119 = vadd.f32 %v1117, %v778
    %v1121 = vrot.slane %v1014, 6
    %v1123 = vmul.f32 %v1118, %v1121
    %v1124 = vmul.f32 %v1118, %v1119
    %1126 = vrot.lane.b32.xlu0 %v1124, 64
    %v1127 = vpop.permute.xlu0 %1126
    %v1129 = vadd.f32 %v1123, %v1127
    %v1130 = vtanh.pop %v1129
    %v1131 = vmul.f32 %v1119, %v1130
    %s1132 = scalar_lea.vmem %s1, 4
    %v1133 = vld [vmem:[%s1132] sm:$0x3]
    %1135 = vset.pattern.permute.xlu0 0
    %1136 = vperm.xlu0 %1135, %v1133
    %v1137 = vpop.permute.xlu0 %1136
    %v1140 = vrot.slane %v1131, 6
    %1141 = vrot.lane.b32.xlu0 %v1140, 64
    %v1142 = vpop.permute.xlu0 %1141
    %v1144 = vmul.f32 %v1137, %v1142
    %v1145 = vadd.f32 %v1030, %v1144
    %v1146 = vsel %vm801, %v1142, 0
    %1148 = vmatprep.subr.mxu0 %v729
    %1149 = vmatpush1.msra.mxu0 %v728
    %1150 = vmatprep.subr.mxu0 %v731
    %1151 = vmatpush1.msra.mxu0 %v730
    %1152 = vmatprep.subr.mxu0 %v733
    %1153 = vmatpush1.msra.mxu0 %v732
    %1154 = vmatprep.subr.mxu0 %v735
    %1155 = vmatpush1.msra.mxu0 %v734
    %1156 = vmatprep.subr.mxu0 %v737
    %1157 = vmatpush1.msra.mxu0 %v736
    %1158 = vmatprep.subr.mxu0 %v739
    %1159 = vmatpush1.msra.mxu0 %v738
    %1160 = vmatprep.subr.mxu0 %v741
    %1161 = vmatpush1.msra.mxu0 %v740
    %1162 = vmatprep.subr.mxu0 %v743
    %1163 = vmatpush1.msra.mxu0 %v742
    %1164 = vmatprep.subr.mxu0 0.0
    %1165 = vmatpush1.msra.mxu0 0.0
    %1166 = vmatprep.subr.mxu0 0.0
    %1167 = vmatpush1.msra.mxu0 0.0
    %1168 = vmatprep.subr.mxu0 0.0
    %1169 = vmatpush1.msra.mxu0 0.0
    %1170 = vmatprep.subr.mxu0 0.0
    %1171 = vmatpush1.msra.mxu0 0.0
    %1172 = vmatprep.subr.mxu0 0.0
    %1173 = vmatpush1.msra.mxu0 0.0
    %1174 = vmatprep.subr.mxu0 0.0
    %1175 = vmatpush1.msra.mxu0 0.0
    %1176 = vmatprep.subr.mxu0 0.0
    %1177 = vmatpush1.msra.mxu0 0.0
    %1178 = vmatprep.subr.mxu0 0.0
    %1179 = vmatpush1.msra.mxu0 0.0
    %1180 = vmatprep.subr.mxu0 0.0
    %1181 = vmatpush1.msra.mxu0 0.0
    %1182 = vmatprep.subr.mxu0 0.0
    %1183 = vmatpush1.msra.mxu0 0.0
    %1184 = vmatprep.subr.mxu0 0.0
    %1185 = vmatpush1.msra.mxu0 0.0
    %1186 = vmatprep.subr.mxu0 0.0
    %1187 = vmatpush1.msra.mxu0 0.0
    %1188 = vmatprep.subr.mxu0 0.0
    %1189 = vmatpush1.msra.mxu0 0.0
    %1190 = vmatprep.subr.mxu0 0.0
    %1191 = vmatpush1.msra.mxu0 0.0
    %1192 = vmatprep.subr.mxu0 0.0
    %1193 = vmatpush1.msra.mxu0 0.0
    %1194 = vmatprep.subr.mxu0 0.0
    %1195 = vmatpush1.msra.mxu0 0.0
    %1196 = vmatprep.subr.mxu0 0.0
    %1197 = vmatpush1.msra.mxu0 0.0
    %1198 = vmatprep.subr.mxu0 0.0
    %1199 = vmatpush1.msra.mxu0 0.0
    %1200 = vmatprep.subr.mxu0 0.0
    %1201 = vmatpush1.msra.mxu0 0.0
    %1202 = vmatprep.subr.mxu0 0.0
    %1203 = vmatpush1.msra.mxu0 0.0
    %1204 = vmatprep.subr.mxu0 0.0
    %1205 = vmatpush1.msra.mxu0 0.0
    %1206 = vmatprep.subr.mxu0 0.0
    %1207 = vmatpush1.msra.mxu0 0.0
    %1208 = vmatprep.subr.mxu0 0.0
    %1209 = vmatpush1.msra.mxu0 0.0
    %1210 = vmatprep.subr.mxu0 0.0
    %1211 = vmatpush1.msra.mxu0 0.0
    %1212 = vmatprep.mubr.f32.mxu0 0.0
    %1213 = vmatmul.mubr.f32.gmra.mrb[0].mxu0 %v1146
    %v1214 = vpop.f32.mrb[0].mxu0
    %v1215 = vadd.f32 0.0, %v1214
    %v1216 = vpop.f32.mrb[0].mxu0
    %v1217 = vadd.f32 0.0, %v1216
    %1218 = vdwg.mxu0
    %v1219 = vadd.f32 %v718, %v1215
    %v1220 = vadd.f32 %v720, %v1217
    %v1221 = vmul.f32 %v1219, %v757
    %v1222 = vmul.f32 %v1220, %v761
    %v1223 = vtanh.pop %v1221
    %v1224 = vtanh.pop %v1222
    %v1225 = vmul.f32 %v1223, %v757
    %v1226 = vmul.f32 %v1224, %v761
    %v1227 = vadd.f32 %v1225, %v774
    %v1228 = vadd.f32 %v1226, %v778
    %v1230 = vrot.slane %v1129, 6
    %v1232 = vmul.f32 %v1227, %v1230
    %v1233 = vmul.f32 %v1227, %v1228
    %1235 = vrot.lane.b32.xlu0 %v1233, 64
    %v1236 = vpop.permute.xlu0 %1235
    %v1238 = vadd.f32 %v1232, %v1236
    %v1239 = vtanh.pop %v1238
    %v1240 = vmul.f32 %v1228, %v1239
    %s1241 = scalar_lea.vmem %s1, 6
    %v1242 = vld [vmem:[%s1241] sm:$0x3]
    %1244 = vset.pattern.permute.xlu0 0
    %1245 = vperm.xlu0 %1244, %v1242
    %v1246 = vpop.permute.xlu0 %1245
    %v1248 = vmul.f32 %v1246, %v1240
    %1250 = vrot.lane.b32.xlu0 %v1248, 64
    %v1251 = vpop.permute.xlu0 %1250
    %v1253 = vadd.f32 %v1145, %v1251
    %1255 = vrot.lane.b32.xlu0 %v1240, 64
    %v1256 = vpop.permute.xlu0 %1255
    %v1257 = vsel %vm801, %v1256, 0
    %1259 = vmatprep.subr.mxu0 %v729
    %1260 = vmatpush1.msra.mxu0 %v728
    %1261 = vmatprep.subr.mxu0 %v731
    %1262 = vmatpush1.msra.mxu0 %v730
    %1263 = vmatprep.subr.mxu0 %v733
    %1264 = vmatpush1.msra.mxu0 %v732
    %1265 = vmatprep.subr.mxu0 %v735
    %1266 = vmatpush1.msra.mxu0 %v734
    %1267 = vmatprep.subr.mxu0 %v737
    %1268 = vmatpush1.msra.mxu0 %v736
    %1269 = vmatprep.subr.mxu0 %v739
    %1270 = vmatpush1.msra.mxu0 %v738
    %1271 = vmatprep.subr.mxu0 %v741
    %1272 = vmatpush1.msra.mxu0 %v740
    %1273 = vmatprep.subr.mxu0 %v743
    %1274 = vmatpush1.msra.mxu0 %v742
    %1275 = vmatprep.subr.mxu0 0.0
    %1276 = vmatpush1.msra.mxu0 0.0
    %1277 = vmatprep.subr.mxu0 0.0
    %1278 = vmatpush1.msra.mxu0 0.0
    %1279 = vmatprep.subr.mxu0 0.0
    %1280 = vmatpush1.msra.mxu0 0.0
    %1281 = vmatprep.subr.mxu0 0.0
    %1282 = vmatpush1.msra.mxu0 0.0
    %1283 = vmatprep.subr.mxu0 0.0
    %1284 = vmatpush1.msra.mxu0 0.0
    %1285 = vmatprep.subr.mxu0 0.0
    %1286 = vmatpush1.msra.mxu0 0.0
    %1287 = vmatprep.subr.mxu0 0.0
    %1288 = vmatpush1.msra.mxu0 0.0
    %1289 = vmatprep.subr.mxu0 0.0
    %1290 = vmatpush1.msra.mxu0 0.0
    %1291 = vmatprep.subr.mxu0 0.0
    %1292 = vmatpush1.msra.mxu0 0.0
    %1293 = vmatprep.subr.mxu0 0.0
    %1294 = vmatpush1.msra.mxu0 0.0
    %1295 = vmatprep.subr.mxu0 0.0
    %1296 = vmatpush1.msra.mxu0 0.0
    %1297 = vmatprep.subr.mxu0 0.0
    %1298 = vmatpush1.msra.mxu0 0.0
    %1299 = vmatprep.subr.mxu0 0.0
    %1300 = vmatpush1.msra.mxu0 0.0
    %1301 = vmatprep.subr.mxu0 0.0
    %1302 = vmatpush1.msra.mxu0 0.0
    %1303 = vmatprep.subr.mxu0 0.0
    %1304 = vmatpush1.msra.mxu0 0.0
    %1305 = vmatprep.subr.mxu0 0.0
    %1306 = vmatpush1.msra.mxu0 0.0
    %1307 = vmatprep.subr.mxu0 0.0
    %1308 = vmatpush1.msra.mxu0 0.0
    %1309 = vmatprep.subr.mxu0 0.0
    %1310 = vmatpush1.msra.mxu0 0.0
    %1311 = vmatprep.subr.mxu0 0.0
    %1312 = vmatpush1.msra.mxu0 0.0
    %1313 = vmatprep.subr.mxu0 0.0
    %1314 = vmatpush1.msra.mxu0 0.0
    %1315 = vmatprep.subr.mxu0 0.0
    %1316 = vmatpush1.msra.mxu0 0.0
    %1317 = vmatprep.subr.mxu0 0.0
    %1318 = vmatpush1.msra.mxu0 0.0
    %1319 = vmatprep.subr.mxu0 0.0
    %1320 = vmatpush1.msra.mxu0 0.0
    %1321 = vmatprep.subr.mxu0 0.0
    %1322 = vmatpush1.msra.mxu0 0.0
    %1323 = vmatprep.mubr.f32.mxu0 0.0
    %1324 = vmatmul.mubr.f32.gmra.mrb[0].mxu0 %v1257
    %v1325 = vpop.f32.mrb[0].mxu0
    %v1326 = vadd.f32 0.0, %v1325
    %v1327 = vpop.f32.mrb[0].mxu0
    %v1328 = vadd.f32 0.0, %v1327
    %1329 = vdwg.mxu0
    %v1332 = vrot.slane %v1326, 6
    %v1333 = vrot.slane %v1328, 6
    %v1336 = vadd.f32 %v718, %v1332
    %v1337 = vadd.f32 %v720, %v1333
    %v1338 = vmul.f32 %v1336, %v757
    %v1339 = vmul.f32 %v1337, %v761
    %v1340 = vtanh.pop %v1338
    %v1341 = vtanh.pop %v1339
    %v1342 = vmul.f32 %v1340, %v757
    %v1343 = vmul.f32 %v1341, %v761
    %v1344 = vadd.f32 %v1342, %v774
    %v1345 = vadd.f32 %v1343, %v778
    %v1347 = vrot.slane %v1238, 6
    %v1349 = vmul.f32 %v1344, %v1347
    %v1350 = vmul.f32 %v1344, %v1345
    %1352 = vrot.lane.b32.xlu0 %v1350, 64
    %v1353 = vpop.permute.xlu0 %1352
    %v1355 = vadd.f32 %v1349, %v1353
    %v1356 = vtanh.pop %v1355
    %v1357 = vmul.f32 %v1345, %v1356
    %s1358 = scalar_lea.vmem %s1, 8
    %v1359 = vld [vmem:[%s1358] sm:$0x3]
    %1361 = vset.pattern.permute.xlu0 0
    %1362 = vperm.xlu0 %1361, %v1359
    %v1363 = vpop.permute.xlu0 %1362
    %v1366 = vrot.slane %v1357, 2
    %1367 = vrot.lane.b32.xlu0 %v1366, 64
    %v1368 = vpop.permute.xlu0 %1367
    %v1370 = vmul.f32 %v1363, %v1368
    %v1371 = vadd.f32 %v1253, %v1370
    %v1372 = vsel %vm801, %v1368, 0
    %1374 = vmatprep.subr.mxu0 %v729
    %1375 = vmatpush1.msra.mxu0 %v728
    %1376 = vmatprep.subr.mxu0 %v731
    %1377 = vmatpush1.msra.mxu0 %v730
    %1378 = vmatprep.subr.mxu0 %v733
    %1379 = vmatpush1.msra.mxu0 %v732
    %1380 = vmatprep.subr.mxu0 %v735
    %1381 = vmatpush1.msra.mxu0 %v734
    %1382 = vmatprep.subr.mxu0 %v737
    %1383 = vmatpush1.msra.mxu0 %v736
    %1384 = vmatprep.subr.mxu0 %v739
    %1385 = vmatpush1.msra.mxu0 %v738
    %1386 = vmatprep.subr.mxu0 %v741
    %1387 = vmatpush1.msra.mxu0 %v740
    %1388 = vmatprep.subr.mxu0 %v743
    %1389 = vmatpush1.msra.mxu0 %v742
    %1390 = vmatprep.subr.mxu0 0.0
    %1391 = vmatpush1.msra.mxu0 0.0
    %1392 = vmatprep.subr.mxu0 0.0
    %1393 = vmatpush1.msra.mxu0 0.0
    %1394 = vmatprep.subr.mxu0 0.0
    %1395 = vmatpush1.msra.mxu0 0.0
    %1396 = vmatprep.subr.mxu0 0.0
    %1397 = vmatpush1.msra.mxu0 0.0
    %1398 = vmatprep.subr.mxu0 0.0
    %1399 = vmatpush1.msra.mxu0 0.0
    %1400 = vmatprep.subr.mxu0 0.0
    %1401 = vmatpush1.msra.mxu0 0.0
    %1402 = vmatprep.subr.mxu0 0.0
    %1403 = vmatpush1.msra.mxu0 0.0
    %1404 = vmatprep.subr.mxu0 0.0
    %1405 = vmatpush1.msra.mxu0 0.0
    %1406 = vmatprep.subr.mxu0 0.0
    %1407 = vmatpush1.msra.mxu0 0.0
    %1408 = vmatprep.subr.mxu0 0.0
    %1409 = vmatpush1.msra.mxu0 0.0
    %1410 = vmatprep.subr.mxu0 0.0
    %1411 = vmatpush1.msra.mxu0 0.0
    %1412 = vmatprep.subr.mxu0 0.0
    %1413 = vmatpush1.msra.mxu0 0.0
    %1414 = vmatprep.subr.mxu0 0.0
    %1415 = vmatpush1.msra.mxu0 0.0
    %1416 = vmatprep.subr.mxu0 0.0
    %1417 = vmatpush1.msra.mxu0 0.0
    %1418 = vmatprep.subr.mxu0 0.0
    %1419 = vmatpush1.msra.mxu0 0.0
    %1420 = vmatprep.subr.mxu0 0.0
    %1421 = vmatpush1.msra.mxu0 0.0
    %1422 = vmatprep.subr.mxu0 0.0
    %1423 = vmatpush1.msra.mxu0 0.0
    %1424 = vmatprep.subr.mxu0 0.0
    %1425 = vmatpush1.msra.mxu0 0.0
    %1426 = vmatprep.subr.mxu0 0.0
    %1427 = vmatpush1.msra.mxu0 0.0
    %1428 = vmatprep.subr.mxu0 0.0
    %1429 = vmatpush1.msra.mxu0 0.0
    %1430 = vmatprep.subr.mxu0 0.0
    %1431 = vmatpush1.msra.mxu0 0.0
    %1432 = vmatprep.subr.mxu0 0.0
    %1433 = vmatpush1.msra.mxu0 0.0
    %1434 = vmatprep.subr.mxu0 0.0
    %1435 = vmatpush1.msra.mxu0 0.0
    %1436 = vmatprep.subr.mxu0 0.0
    %1437 = vmatpush1.msra.mxu0 0.0
    %1438 = vmatprep.mubr.f32.mxu0 0.0
    %1439 = vmatmul.mubr.f32.gmra.mrb[0].mxu0 %v1372
    %v1440 = vpop.f32.mrb[0].mxu0
    %v1441 = vadd.f32 0.0, %v1440
    %v1442 = vpop.f32.mrb[0].mxu0
    %v1443 = vadd.f32 0.0, %v1442
    %1444 = vdwg.mxu0
    %v1447 = vrot.slane %v1441, 4
    %v1448 = vrot.slane %v1443, 4
    %v1451 = vadd.f32 %v718, %v1447
    %v1452 = vadd.f32 %v720, %v1448
    %v1453 = vmul.f32 %v1451, %v757
    %v1454 = vmul.f32 %v1452, %v761
    %v1455 = vtanh.pop %v1453
    %v1456 = vtanh.pop %v1454
    %v1457 = vmul.f32 %v1455, %v757
    %v1458 = vmul.f32 %v1456, %v761
    %v1459 = vadd.f32 %v1457, %v774
    %v1460 = vadd.f32 %v1458, %v778
    %v1462 = vrot.slane %v1355, 6
    %v1464 = vmul.f32 %v1459, %v1462
    %v1465 = vmul.f32 %v1459, %v1460
    %1467 = vrot.lane.b32.xlu0 %v1465, 64
    %v1468 = vpop.permute.xlu0 %1467
    %v1470 = vadd.f32 %v1464, %v1468
    %v1471 = vtanh.pop %v1470
    %v1472 = vmul.f32 %v1460, %v1471
    %s1473 = scalar_lea.vmem %s1, 10
    %v1474 = vld [vmem:[%s1473] sm:$0x3]
    %1476 = vset.pattern.permute.xlu0 0
    %1477 = vperm.xlu0 %1476, %v1474
    %v1478 = vpop.permute.xlu0 %1477
    %v1481 = vrot.slane %v1472, 4
    %1482 = vrot.lane.b32.xlu0 %v1481, 64
    %v1483 = vpop.permute.xlu0 %1482
    %v1485 = vmul.f32 %v1478, %v1483
    %v1486 = vadd.f32 %v1371, %v1485
    %v1487 = vsel %vm801, %v1483, 0
    %1489 = vmatprep.subr.mxu0 %v729
    %1490 = vmatpush1.msra.mxu0 %v728
    %1491 = vmatprep.subr.mxu0 %v731
    %1492 = vmatpush1.msra.mxu0 %v730
    %1493 = vmatprep.subr.mxu0 %v733
    %1494 = vmatpush1.msra.mxu0 %v732
    %1495 = vmatprep.subr.mxu0 %v735
    %1496 = vmatpush1.msra.mxu0 %v734
    %1497 = vmatprep.subr.mxu0 %v737
    %1498 = vmatpush1.msra.mxu0 %v736
    %1499 = vmatprep.subr.mxu0 %v739
    %1500 = vmatpush1.msra.mxu0 %v738
    %1501 = vmatprep.subr.mxu0 %v741
    %1502 = vmatpush1.msra.mxu0 %v740
    %1503 = vmatprep.subr.mxu0 %v743
    %1504 = vmatpush1.msra.mxu0 %v742
    %1505 = vmatprep.subr.mxu0 0.0
    %1506 = vmatpush1.msra.mxu0 0.0
    %1507 = vmatprep.subr.mxu0 0.0
    %1508 = vmatpush1.msra.mxu0 0.0
    %1509 = vmatprep.subr.mxu0 0.0
    %1510 = vmatpush1.msra.mxu0 0.0
    %1511 = vmatprep.subr.mxu0 0.0
    %1512 = vmatpush1.msra.mxu0 0.0
    %1513 = vmatprep.subr.mxu0 0.0
    %1514 = vmatpush1.msra.mxu0 0.0
    %1515 = vmatprep.subr.mxu0 0.0
    %1516 = vmatpush1.msra.mxu0 0.0
    %1517 = vmatprep.subr.mxu0 0.0
    %1518 = vmatpush1.msra.mxu0 0.0
    %1519 = vmatprep.subr.mxu0 0.0
    %1520 = vmatpush1.msra.mxu0 0.0
    %1521 = vmatprep.subr.mxu0 0.0
    %1522 = vmatpush1.msra.mxu0 0.0
    %1523 = vmatprep.subr.mxu0 0.0
    %1524 = vmatpush1.msra.mxu0 0.0
    %1525 = vmatprep.subr.mxu0 0.0
    %1526 = vmatpush1.msra.mxu0 0.0
    %1527 = vmatprep.subr.mxu0 0.0
    %1528 = vmatpush1.msra.mxu0 0.0
    %1529 = vmatprep.subr.mxu0 0.0
    %1530 = vmatpush1.msra.mxu0 0.0
    %1531 = vmatprep.subr.mxu0 0.0
    %1532 = vmatpush1.msra.mxu0 0.0
    %1533 = vmatprep.subr.mxu0 0.0
    %1534 = vmatpush1.msra.mxu0 0.0
    %1535 = vmatprep.subr.mxu0 0.0
    %1536 = vmatpush1.msra.mxu0 0.0
    %1537 = vmatprep.subr.mxu0 0.0
    %1538 = vmatpush1.msra.mxu0 0.0
    %1539 = vmatprep.subr.mxu0 0.0
    %1540 = vmatpush1.msra.mxu0 0.0
    %1541 = vmatprep.subr.mxu0 0.0
    %1542 = vmatpush1.msra.mxu0 0.0
    %1543 = vmatprep.subr.mxu0 0.0
    %1544 = vmatpush1.msra.mxu0 0.0
    %1545 = vmatprep.subr.mxu0 0.0
    %1546 = vmatpush1.msra.mxu0 0.0
    %1547 = vmatprep.subr.mxu0 0.0
    %1548 = vmatpush1.msra.mxu0 0.0
    %1549 = vmatprep.subr.mxu0 0.0
    %1550 = vmatpush1.msra.mxu0 0.0
    %1551 = vmatprep.subr.mxu0 0.0
    %1552 = vmatpush1.msra.mxu0 0.0
    %1553 = vmatprep.mubr.f32.mxu0 0.0
    %1554 = vmatmul.mubr.f32.gmra.mrb[0].mxu0 %v1487
    %v1555 = vpop.f32.mrb[0].mxu0
    %v1556 = vadd.f32 0.0, %v1555
    %v1557 = vpop.f32.mrb[0].mxu0
    %v1558 = vadd.f32 0.0, %v1557
    %1559 = vdwg.mxu0
    %v1562 = vrot.slane %v1556, 2
    %v1563 = vrot.slane %v1558, 2
    %v1566 = vadd.f32 %v718, %v1562
    %v1567 = vadd.f32 %v720, %v1563
    %v1568 = vmul.f32 %v1566, %v757
    %v1569 = vmul.f32 %v1567, %v761
    %v1570 = vtanh.pop %v1568
    %v1571 = vtanh.pop %v1569
    %v1572 = vmul.f32 %v1570, %v757
    %v1573 = vmul.f32 %v1571, %v761
    %v1574 = vadd.f32 %v1572, %v774
    %v1575 = vadd.f32 %v1573, %v778
    %v1577 = vrot.slane %v1470, 6
    %v1579 = vmul.f32 %v1574, %v1577
    %v1580 = vmul.f32 %v1574, %v1575
    %1582 = vrot.lane.b32.xlu0 %v1580, 64
    %v1583 = vpop.permute.xlu0 %1582
    %v1585 = vadd.f32 %v1579, %v1583
    %v1586 = vtanh.pop %v1585
    %v1587 = vmul.f32 %v1575, %v1586
    %s1588 = scalar_lea.vmem %s1, 12
    %v1589 = vld [vmem:[%s1588] sm:$0x3]
    %1591 = vset.pattern.permute.xlu0 0
    %1592 = vperm.xlu0 %1591, %v1589
    %v1593 = vpop.permute.xlu0 %1592
    %v1596 = vrot.slane %v1587, 6
    %1597 = vrot.lane.b32.xlu0 %v1596, 64
    %v1598 = vpop.permute.xlu0 %1597
    %v1600 = vmul.f32 %v1593, %v1598
    %v1601 = vadd.f32 %v1486, %v1600
    %v1602 = vsel %vm801, %v1598, 0
    %1604 = vmatprep.subr.mxu0 %v729
    %1605 = vmatpush1.msra.mxu0 %v728
    %1606 = vmatprep.subr.mxu0 %v731
    %1607 = vmatpush1.msra.mxu0 %v730
    %1608 = vmatprep.subr.mxu0 %v733
    %1609 = vmatpush1.msra.mxu0 %v732
    %1610 = vmatprep.subr.mxu0 %v735
    %1611 = vmatpush1.msra.mxu0 %v734
    %1612 = vmatprep.subr.mxu0 %v737
    %1613 = vmatpush1.msra.mxu0 %v736
    %1614 = vmatprep.subr.mxu0 %v739
    %1615 = vmatpush1.msra.mxu0 %v738
    %1616 = vmatprep.subr.mxu0 %v741
    %1617 = vmatpush1.msra.mxu0 %v740
    %1618 = vmatprep.subr.mxu0 %v743
    %1619 = vmatpush1.msra.mxu0 %v742
    %1620 = vmatprep.subr.mxu0 0.0
    %1621 = vmatpush1.msra.mxu0 0.0
    %1622 = vmatprep.subr.mxu0 0.0
    %1623 = vmatpush1.msra.mxu0 0.0
    %1624 = vmatprep.subr.mxu0 0.0
    %1625 = vmatpush1.msra.mxu0 0.0
    %1626 = vmatprep.subr.mxu0 0.0
    %1627 = vmatpush1.msra.mxu0 0.0
    %1628 = vmatprep.subr.mxu0 0.0
    %1629 = vmatpush1.msra.mxu0 0.0
    %1630 = vmatprep.subr.mxu0 0.0
    %1631 = vmatpush1.msra.mxu0 0.0
    %1632 = vmatprep.subr.mxu0 0.0
    %1633 = vmatpush1.msra.mxu0 0.0
    %1634 = vmatprep.subr.mxu0 0.0
    %1635 = vmatpush1.msra.mxu0 0.0
    %1636 = vmatprep.subr.mxu0 0.0
    %1637 = vmatpush1.msra.mxu0 0.0
    %1638 = vmatprep.subr.mxu0 0.0
    %1639 = vmatpush1.msra.mxu0 0.0
    %1640 = vmatprep.subr.mxu0 0.0
    %1641 = vmatpush1.msra.mxu0 0.0
    %1642 = vmatprep.subr.mxu0 0.0
    %1643 = vmatpush1.msra.mxu0 0.0
    %1644 = vmatprep.subr.mxu0 0.0
    %1645 = vmatpush1.msra.mxu0 0.0
    %1646 = vmatprep.subr.mxu0 0.0
    %1647 = vmatpush1.msra.mxu0 0.0
    %1648 = vmatprep.subr.mxu0 0.0
    %1649 = vmatpush1.msra.mxu0 0.0
    %1650 = vmatprep.subr.mxu0 0.0
    %1651 = vmatpush1.msra.mxu0 0.0
    %1652 = vmatprep.subr.mxu0 0.0
    %1653 = vmatpush1.msra.mxu0 0.0
    %1654 = vmatprep.subr.mxu0 0.0
    %1655 = vmatpush1.msra.mxu0 0.0
    %1656 = vmatprep.subr.mxu0 0.0
    %1657 = vmatpush1.msra.mxu0 0.0
    %1658 = vmatprep.subr.mxu0 0.0
    %1659 = vmatpush1.msra.mxu0 0.0
    %1660 = vmatprep.subr.mxu0 0.0
    %1661 = vmatpush1.msra.mxu0 0.0
    %1662 = vmatprep.subr.mxu0 0.0
    %1663 = vmatpush1.msra.mxu0 0.0
    %1664 = vmatprep.subr.mxu0 0.0
    %1665 = vmatpush1.msra.mxu0 0.0
    %1666 = vmatprep.subr.mxu0 0.0
    %1667 = vmatpush1.msra.mxu0 0.0
    %1668 = vmatprep.mubr.f32.mxu0 0.0
    %1669 = vmatmul.mubr.f32.gmra.mrb[0].mxu0 %v1602
    %v1670 = vpop.f32.mrb[0].mxu0
    %v1671 = vadd.f32 0.0, %v1670
    %v1672 = vpop.f32.mrb[0].mxu0
    %v1673 = vadd.f32 0.0, %v1672
    %1674 = vdwg.mxu0
    %v1675 = vadd.f32 %v724, %v1671
    %v1676 = vadd.f32 %v726, %v1673
    %v1677 = vmul.f32 %v1675, %v757
    %v1678 = vmul.f32 %v1676, %v761
    %v1679 = vtanh.pop %v1677
    %v1680 = vtanh.pop %v1678
    %v1681 = vmul.f32 %v1679, %v757
    %v1682 = vmul.f32 %v1680, %v761
    %v1683 = vadd.f32 %v1681, %v774
    %v1684 = vadd.f32 %v1682, %v778
    %v1686 = vrot.slane %v1585, 6
    %v1688 = vmul.f32 %v1683, %v1686
    %v1689 = vmul.f32 %v1683, %v1684
    %1691 = vrot.lane.b32.xlu0 %v1689, 64
    %v1692 = vpop.permute.xlu0 %1691
    %v1694 = vadd.f32 %v1688, %v1692
    %v1695 = vtanh.pop %v1694
    %v1696 = vmul.f32 %v1684, %v1695
    %s1697 = scalar_lea.vmem %s1, 14
    %v1698 = vld [vmem:[%s1697] sm:$0x3]
    %1700 = vset.pattern.permute.xlu0 0
    %1701 = vperm.xlu0 %1700, %v1698
    %v1702 = vpop.permute.xlu0 %1701
    %v1704 = vmul.f32 %v1702, %v1696
    %1706 = vrot.lane.b32.xlu0 %v1704, 64
    %v1707 = vpop.permute.xlu0 %1706
    %v1709 = vadd.f32 %v1601, %v1707
    %v1710 = vld [vmem:[#allocation2 + $0x140] sm:$0xff]
    %v1711 = vld [vmem:[#allocation2 + $0x150] sm:$0xff]
    %v1712 = vld [vmem:[#allocation2 + $0x160] sm:$0xff]
    %v1713 = vld [vmem:[#allocation2 + $0x170] sm:$0xff]
    %v1714 = vld [vmem:[#allocation2 + $0x180] ss:$0 sm:$0xff]
    %1716 = vrot.lane.b32.xlu0 %v1709, 96
    %v1717 = vpop.permute.xlu0 %1716
    %vm1718 = vcmask 261120
    %v1719 = vsel %vm1718, %v1717, 0
    %1721 = vmatprep.subr.mxu0 0.0
    %1722 = vmatpush1.msra.mxu0 %v1710
    %1723 = vmatprep.subr.mxu0 0.0
    %1724 = vmatpush1.msra.mxu0 %v1711
    %1725 = vmatprep.subr.mxu0 0.0
    %1726 = vmatpush1.msra.mxu0 %v1712
    %1727 = vmatprep.subr.mxu0 0.0
    %1728 = vmatpush1.msra.mxu0 %v1713
    %1729 = vmatprep.subr.mxu0 0.0
    %1730 = vmatpush1.msra.mxu0 0.0
    %1731 = vmatprep.subr.mxu0 0.0
    %1732 = vmatpush1.msra.mxu0 0.0
    %1733 = vmatprep.subr.mxu0 0.0
    %1734 = vmatpush1.msra.mxu0 0.0
    %1735 = vmatprep.subr.mxu0 0.0
    %1736 = vmatpush1.msra.mxu0 0.0
    %1737 = vmatprep.subr.mxu0 0.0
    %1738 = vmatpush1.msra.mxu0 0.0
    %1739 = vmatprep.subr.mxu0 0.0
    %1740 = vmatpush1.msra.mxu0 0.0
    %1741 = vmatprep.subr.mxu0 0.0
    %1742 = vmatpush1.msra.mxu0 0.0
    %1743 = vmatprep.subr.mxu0 0.0
    %1744 = vmatpush1.msra.mxu0 0.0
    %1745 = vmatprep.subr.mxu0 0.0
    %1746 = vmatpush1.msra.mxu0 0.0
    %1747 = vmatprep.subr.mxu0 0.0
    %1748 = vmatpush1.msra.mxu0 0.0
    %1749 = vmatprep.subr.mxu0 0.0
    %1750 = vmatpush1.msra.mxu0 0.0
    %1751 = vmatprep.subr.mxu0 0.0
    %1752 = vmatpush1.msra.mxu0 0.0
    %1753 = vmatprep.subr.mxu0 0.0
    %1754 = vmatpush1.msra.mxu0 0.0
    %1755 = vmatprep.subr.mxu0 0.0
    %1756 = vmatpush1.msra.mxu0 0.0
    %1757 = vmatprep.subr.mxu0 0.0
    %1758 = vmatpush1.msra.mxu0 0.0
    %1759 = vmatprep.subr.mxu0 0.0
    %1760 = vmatpush1.msra.mxu0 0.0
    %1761 = vmatprep.subr.mxu0 0.0
    %1762 = vmatpush1.msra.mxu0 0.0
    %1763 = vmatprep.subr.mxu0 0.0
    %1764 = vmatpush1.msra.mxu0 0.0
    %1765 = vmatprep.subr.mxu0 0.0
    %1766 = vmatpush1.msra.mxu0 0.0
    %1767 = vmatprep.subr.mxu0 0.0
    %1768 = vmatpush1.msra.mxu0 0.0
    %1769 = vmatprep.subr.mxu0 0.0
    %1770 = vmatpush1.msra.mxu0 0.0
    %1771 = vmatprep.subr.mxu0 0.0
    %1772 = vmatpush1.msra.mxu0 0.0
    %1773 = vmatprep.subr.mxu0 0.0
    %1774 = vmatpush1.msra.mxu0 0.0
    %1775 = vmatprep.subr.mxu0 0.0
    %1776 = vmatpush1.msra.mxu0 0.0
    %1777 = vmatprep.subr.mxu0 0.0
    %1778 = vmatpush1.msra.mxu0 0.0
    %1779 = vmatprep.subr.mxu0 0.0
    %1780 = vmatpush1.msra.mxu0 0.0
    %1781 = vmatprep.subr.mxu0 0.0
    %1782 = vmatpush1.msra.mxu0 0.0
    %1783 = vmatprep.subr.mxu0 0.0
    %1784 = vmatpush1.msra.mxu0 0.0
    %1785 = vmatprep.mubr.f32.mxu0 0.0
    %1786 = vmatmul.mubr.f32.gmra.mrb[0].mxu0 %v1719
    %v1787 = vpop.f32.mrb[0].mxu0
    %v1788 = vadd.f32 %v1714, %v1787
    %v1789 = vpop.f32.mrb[0].mxu0
    %1790 = vdwg.mxu0
    %v1791 = vmax.f32 %v1788, 0.0
    %vm1792 = vcmask 254976
    %1793 = vst.msk [vmem:[#allocation5] sm:$0x3] %vm1792, %v1791
    // Predicated region
    $region22: #{forward.1} parent=1 // pred_check
      _
    $region23: #{forward.1} parent=1 // pred_check_branch
      %1795 = sbr.rel (0) target = $region25
    $region24: #{forward.1} parent=1 // pred_region
      %s1797 = ssub.s32 32, 32
      %1798 = vsyncadd [#allocation4], %s1797
      %s1800 = sshll.u32 [#allocation5], 4
      %s1801 = int_to_ptr.vmem [resolvable:$true] %s1800
      %1803 = dma.vmem_to_hbm [thread:$0]  %s1801, 32, %s4, [#allocation4]
    $region25: #{forward.1} parent=1 // pred_fallthru
      _
    // Predicated region
    $region26: #{forward.1} parent=1 // pred_check
      _
    $region27: #{forward.1} parent=1 // pred_check_branch
      %1805 = sbr.rel (0) target = $region29
    $region28: #{forward.1} parent=1 // pred_region
      %1806 = dma.done [#allocation4], 32
    $region29: #{forward.1} parent=1 // pred_fallthru
      _
    %1807 = vsyncpa [#allocation3], 1
    %1808 = vsyncpa [#allocation4], 1

</llo_original>
